<compile_context>
chip_gen: v5e
topology: v5e:2x2
jax: 0.10.0
libtpu: 0.0.40
codegen_flags: <defaults>
</compile_context>

<pallas_src>
import jax
import jax.numpy as jnp
from jax import lax
from jax.experimental import pallas as pl
from jax.experimental.pallas import tpu as pltpu

LANE = 128
SUBLANE = 8


def _round_up(x, m):
    return ((x + m - 1) // m) * m


# --------------------------------------------------------------------------- #
# Kernel
# --------------------------------------------------------------------------- #
def _encoder_kernel(ids_ref, h0_ref, emb_ref, wih_ref, whh_ref, b_ref,
                    out_ref, hn_ref, x_scr, xg_scr):
    # ids_ref : (B, T)      int32 SMEM  token ids (batch-first, PyTorch layout)
    # h0_ref  : (2, B, H)   f32   VMEM  initial hidden per direction
    # emb_ref : (V, 1, E)   f32   VMEM  embedding table
    # wih_ref : (E, 8H)     bf16  VMEM  [fwd i|f|g|o | bwd i|f|g|o] gate-packed
    # whh_ref : (2, H, 4H)  bf16  VMEM  per-direction recurrent weights
    # b_ref   : (1, 8H)     f32   VMEM  b_ih + b_hh, both directions
    # out_ref : (B, T, 2H)  f32         batch-first output (PyTorch convention)
    # hn_ref  : (2, B, H)   f32         final hidden per direction
    # x_scr   : (T*Bp, E)   f32   VMEM  gathered, batch-padded, time-major embeddings
    # xg_scr  : (T*Bp, 8H)  f32   VMEM  hoisted input projection, both directions
    B, T = ids_ref.shape
    H = h0_ref.shape[2]
    Bp = x_scr.shape[0] // T
    G = 4 * H                                  # packed per-direction gate width

    # ---- (1) In-kernel embedding gather (ids in SMEM, tiny table in VMEM).
    x_scr[...] = jnp.zeros_like(x_scr)         # keep padded batch rows finite
    for t in range(T):
        for b in range(B):
            tok = ids_ref[b, t]                # scalar int32 from SMEM
            r = t * Bp + b                     # static row offset
            x_scr[r:r + 1, :] = emb_ref[tok]   # dynamic leading-dim row load (1, E)

    # ---- (2) Hoisted input projection: ONE MXU matmul, bias folded once.
    xg_scr[...] = (jnp.dot(x_scr[...].astype(jnp.bfloat16), wih_ref[...],
                           preferred_element_type=jnp.float32)
                   + b_ref[...])

    # ---- (3) Recurrence: per-direction (Bp,H)@(H,4H) dots, packed gates.
    whh_f = whh_ref[0]                         # (H, 4H) bf16, loop-invariant
    whh_b = whh_ref[1]

    def pad_batch(h):                          # (B, H) -> (Bp, H)
        if Bp == B:
            return h
        return jnp.concatenate(
            [h, jnp.zeros((Bp - B, H), jnp.float32)], axis=0)

    h_f = pad_batch(h0_ref[0])
    h_b = pad_batch(h0_ref[1])
    c_f = jnp.zeros((Bp, H), jnp.float32)      # c0 = 0, as in the PyTorch forward
    c_b = jnp.zeros((Bp, H), jnp.float32)

    def lstm_step(g, c):
        # One sigmoid + one tanh pass over the whole packed-gate vreg; the
        # 32-lane gate extraction is static lane slicing (XLU-side relayout).
        sg = jax.nn.sigmoid(g)
        tg = jnp.tanh(g)
        i = sg[:, 0 * H:1 * H]
        f = sg[:, 1 * H:2 * H]
        gg = tg[:, 2 * H:3 * H]
        o = sg[:, 3 * H:4 * H]
        c_new = f * c + i * gg
        return o * jnp.tanh(c_new), c_new

    # T is small & static -> full unroll lets LLO interleave the fwd/bwd chains.
    # TODO(synk): switch to lax.fori_loop(unroll=2) over pl.ds time slices for T > ~32.
    for t in range(T):
        tr = T - 1 - t
        hg_f = jnp.dot(h_f.astype(jnp.bfloat16), whh_f,
                       preferred_element_type=jnp.float32)       # (Bp, 4H)
        hg_b = jnp.dot(h_b.astype(jnp.bfloat16), whh_b,
                       preferred_element_type=jnp.float32)
        g_f = xg_scr[t * Bp:(t + 1) * Bp, 0:G] + hg_f
        g_b = xg_scr[tr * Bp:(tr + 1) * Bp, G:2 * G] + hg_b
        h_f, c_f = lstm_step(g_f, c_f)
        h_b, c_b = lstm_step(g_b, c_b)
        # Batch-first stores straight into the unpadded output (B is tiny;
        # at larger B use a time-major VMEM slab + lane-dense writeback).
        for b in range(B):
            out_ref[b, t:t + 1, 0:H] = h_f[b:b + 1, :]
            out_ref[b, tr:tr + 1, H:2 * H] = h_b[b:b + 1, :]

    hn_ref[0] = h_f[0:B, :]
    hn_ref[1] = h_b[0:B, :]


def encoder_forward(input_ids, hidden, emb_packed, wih_cat, whh_st, b_cat):
    """input_ids (B,T) i32, hidden (2,B,H) f32. Returns (output (B,T,2H), h_n (2,B,H))."""
    B, T = input_ids.shape
    H = hidden.shape[2]
    E = emb_packed.shape[2]
    Bp = _round_up(B, SUBLANE)

    vmem = pl.BlockSpec(memory_space=pltpu.MemorySpace.VMEM)
    smem = pl.BlockSpec(memory_space=pltpu.MemorySpace.SMEM)
    out_shapes = (
        jax.ShapeDtypeStruct((B, T, 2 * H), jnp.float32),
        jax.ShapeDtypeStruct((2, B, H), jnp.float32),
    )
    return pl.pallas_call(
        _encoder_kernel,
        out_shape=out_shapes,
        in_specs=[smem, vmem, vmem, vmem, vmem, vmem],
        out_specs=(vmem, vmem),
        scratch_shapes=[
            pltpu.VMEM((T * Bp, E), jnp.float32),       # gathered embeddings
            pltpu.VMEM((T * Bp, 8 * H), jnp.float32),   # hoisted input projection
        ],
    )(input_ids, hidden, emb_packed, wih_cat, whh_st, b_cat)


# --------------------------------------------------------------------------- #
# Module wrapper (parameter packing done once at init; zero glue ops per call)
# --------------------------------------------------------------------------- #
class EncoderRNNPallas:
    """JAX/Pallas port of the PyTorch EncoderRNN forward pass."""

    def __init__(self, input_size, hidden_size, embedding_size, key):
        self.hidden_size = H = hidden_size
        self.embedding_size = E = embedding_size

        ks = jax.random.split(key, 9)
        scale = 1.0 / jnp.sqrt(hidden_size)

        def u(k, shape):
            return jax.random.uniform(k, shape, jnp.float32, -scale, scale)

        # Embedding table (vocab, E)
        self.embedding = jax.random.normal(ks[0], (input_size, E), jnp.float32)

        # PyTorch layout: weight_ih (4H, E), weight_hh (4H, H), biases (4H,), gate order i|f|g|o
        wih_f = u(ks[1], (4 * H, E)).T                      # (E, 4H)
        whh_f = u(ks[2], (4 * H, H)).T                      # (H, 4H)
        b_f = u(ks[3], (4 * H,)) + u(ks[4], (4 * H,))
        wih_b = u(ks[5], (4 * H, E)).T
        whh_b = u(ks[6], (4 * H, H)).T
        b_b = u(ks[7], (4 * H,)) + u(ks[8], (4 * H,))
        self.raw_params = (wih_f, whh_f, b_f, wih_b, whh_b, b_b)   # f32, for reference

        # Kernel-side packed params: gates packed i|f|g|o (no per-gate lane padding),
        # both directions concatenated, MXU operands bf16, bias f32.
        self.emb_packed = self.embedding.reshape(input_size, 1, E)               # (V,1,E) f32
        self.wih_cat = jnp.concatenate([wih_f, wih_b], axis=1).astype(jnp.bfloat16)  # (E, 8H)
        self.whh_st = jnp.stack([whh_f, whh_b]).astype(jnp.bfloat16)             # (2, H, 4H)
        self.b_cat = jnp.concatenate([b_f, b_b])[None, :]                        # (1, 8H) f32

    def __call__(self, input_ids, hidden):
        # input_ids: (B, T) int32, hidden: (2, B, H) f32 -> ((B,T,2H), (2,B,H))
        return encoder_forward(input_ids, hidden, self.emb_packed,
                               self.wih_cat, self.whh_st, self.b_cat)

    def init_hidden(self, batch):
        return jnp.zeros((2, batch, self.hidden_size), jnp.float32)


# --------------------------------------------------------------------------- #
# Pure-JAX reference (lax.scan) for correctness checks
# --------------------------------------------------------------------------- #
def _reference(model, input_ids, hidden, cast_matmul_to_bf16=True):
    emb = jnp.take(model.embedding, input_ids, axis=0)             # (B, T, E)
    H = model.hidden_size
    wih_f, whh_f, b_f, wih_b, whh_b, b_b = model.raw_params
    cast = ((lambda a: a.astype(jnp.bfloat16)) if cast_matmul_to_bf16
            else (lambda a: a))

    def cell(carry, x_t, wih, whh, b):
        h, c = carry
        g = (jnp.dot(cast(x_t), cast(wih), preferred_element_type=jnp.float32)
             + jnp.dot(cast(h), cast(whh), preferred_element_type=jnp.float32)
             + b)
        i = jax.nn.sigmoid(g[:, :H])
        f = jax.nn.sigmoid(g[:, H:2 * H])
        gg = jnp.tanh(g[:, 2 * H:3 * H])
        o = jax.nn.sigmoid(g[:, 3 * H:])
        c = f * c + i * gg
        h = o * jnp.tanh(c)
        return (h, c), h

    x_t = jnp.transpose(emb, (1, 0, 2))
    c0 = jnp.zeros_like(hidden[0])
    (h_f, _), ys_f = lax.scan(lambda cr, x: cell(cr, x, wih_f, whh_f, b_f),
                              (hidden[0], c0), x_t)
    (h_b, _), ys_b = lax.scan(lambda cr, x: cell(cr, x, wih_b, whh_b, b_b),
                              (hidden[1], c0), x_t[::-1])
    ys_b = ys_b[::-1]
    out = jnp.concatenate((jnp.transpose(ys_f, (1, 0, 2)),
                           jnp.transpose(ys_b, (1, 0, 2))), axis=-1)
    return out, jnp.stack((h_f, h_b))


if __name__ == "__main__":
    INPUT_SIZE = 100        # vocab size
    EMBEDDING_SIZE = 16
    HIDDEN_SIZE = 32
    B, T = 2, 8

    key = jax.random.PRNGKey(0)
    k_model, k_ids, k_hid = jax.random.split(key, 3)

    model = EncoderRNNPallas(INPUT_SIZE, HIDDEN_SIZE, EMBEDDING_SIZE, k_model)
    input_ids = jax.random.randint(k_ids, (B, T), 0, INPUT_SIZE, dtype=jnp.int32)
    hidden0 = jax.random.normal(k_hid, (2, B, HIDDEN_SIZE), jnp.float32)

    output, hidden_n = model(input_ids, hidden0)
    output = jax.block_until_ready(output)
    hidden_n = jax.block_until_ready(hidden_n)

    assert output.shape == (B, T, 2 * HIDDEN_SIZE)
    assert hidden_n.shape == (2, B, HIDDEN_SIZE)

    # Tight check against a reference with the same bf16 MXU-operand casts
    # (verifies gather, packing and recurrence plumbing exactly).
    ref_out, ref_hid = _reference(model, input_ids, hidden0, cast_matmul_to_bf16=True)
    assert jnp.allclose(output, ref_out, atol=1e-3, rtol=1e-3)
    assert jnp.allclose(hidden_n, ref_hid, atol=1e-3, rtol=1e-3)

    # Looser check against a pure-f32 reference (only bf16 operand quantization differs).
    ref_out32, ref_hid32 = _reference(model, input_ids, hidden0, cast_matmul_to_bf16=False)
    assert jnp.allclose(output, ref_out32, atol=5e-2, rtol=5e-2)
    assert jnp.allclose(hidden_n, ref_hid32, atol=5e-2, rtol=5e-2)

    print("KERNEL_OK")
</pallas_src>

<mosaic_0001>
module attributes {stable_mosaic.version = 11 : i64} {
  func.func @_encoder_kernel(%arg0: memref<2x8xi32, #tpu.memory_space<smem>>, %arg1: memref<2x2x32xf32, #tpu.memory_space<vmem>>, %arg2: memref<100x1x16xf32, #tpu.memory_space<vmem>>, %arg3: memref<16x256xbf16, #tpu.memory_space<vmem>>, %arg4: memref<2x32x128xbf16, #tpu.memory_space<vmem>>, %arg5: memref<1x256xf32, #tpu.memory_space<vmem>>, %arg6: memref<2x8x64xf32, #tpu.memory_space<vmem>>, %arg7: memref<2x2x32xf32, #tpu.memory_space<vmem>>, %arg8: memref<64x16xf32, #tpu.memory_space<vmem>>, %arg9: memref<64x256xf32, #tpu.memory_space<vmem>>) attributes {dimension_semantics = [], scalar_prefetch = 0 : i64, scratch_operands = 2 : i64, tpu.core_type = #tpu.core_type<tc>} {
    %cst = arith.constant 0.000000e+00 : f32
    %0 = vector.broadcast %cst : f32 to vector<64x16xf32>
    %c0 = arith.constant 0 : index
    %c0_0 = arith.constant 0 : index
    %1 = vector.load %arg8[%c0, %c0_0] : memref<64x16xf32, #tpu.memory_space<vmem>>, vector<64x16xf32>
    tpu.vector_store %arg8[%c0, %c0_0], %0 {strides = array<i32>} : memref<64x16xf32, #tpu.memory_space<vmem>>, vector<64x16xf32>,
    %c0_1 = arith.constant 0 : index
    %c0_2 = arith.constant 0 : index
    %2 = memref.load %arg0[%c0_1, %c0_2] : memref<2x8xi32, #tpu.memory_space<smem>>
    %3 = arith.index_cast %2 : i32 to index
    %c0_3 = arith.constant 0 : index
    %c0_4 = arith.constant 0 : index
    %4 = vector.load %arg2[%3, %c0_3, %c0_4] : memref<100x1x16xf32, #tpu.memory_space<vmem>>, vector<1x1x16xf32>
    %5 = vector.shape_cast %4 : vector<1x1x16xf32> to vector<1x16xf32>
    %c0_5 = arith.constant 0 : index
    %c0_6 = arith.constant 0 : index
    %6 = vector.load %arg8[%c0_5, %c0_6] : memref<64x16xf32, #tpu.memory_space<vmem>>, vector<1x16xf32>
    tpu.vector_store %arg8[%c0_5, %c0_6], %5 {strides = array<i32>} : memref<64x16xf32, #tpu.memory_space<vmem>>, vector<1x16xf32>,
    %c1 = arith.constant 1 : index
    %c0_7 = arith.constant 0 : index
    %7 = memref.load %arg0[%c1, %c0_7] : memref<2x8xi32, #tpu.memory_space<smem>>
    %8 = arith.index_cast %7 : i32 to index
    %c0_8 = arith.constant 0 : index
    %c0_9 = arith.constant 0 : index
    %9 = vector.load %arg2[%8, %c0_8, %c0_9] : memref<100x1x16xf32, #tpu.memory_space<vmem>>, vector<1x1x16xf32>
    %10 = vector.shape_cast %9 : vector<1x1x16xf32> to vector<1x16xf32>
    %c1_10 = arith.constant 1 : index
    %c0_11 = arith.constant 0 : index
    %11 = vector.load %arg8[%c1_10, %c0_11] : memref<64x16xf32, #tpu.memory_space<vmem>>, vector<1x16xf32>
    tpu.vector_store %arg8[%c1_10, %c0_11], %10 {strides = array<i32>} : memref<64x16xf32, #tpu.memory_space<vmem>>, vector<1x16xf32>,
    %c0_12 = arith.constant 0 : index
    %c1_13 = arith.constant 1 : index
    %12 = memref.load %arg0[%c0_12, %c1_13] : memref<2x8xi32, #tpu.memory_space<smem>>
    %13 = arith.index_cast %12 : i32 to index
    %c0_14 = arith.constant 0 : index
    %c0_15 = arith.constant 0 : index
    %14 = vector.load %arg2[%13, %c0_14, %c0_15] : memref<100x1x16xf32, #tpu.memory_space<vmem>>, vector<1x1x16xf32>
    %15 = vector.shape_cast %14 : vector<1x1x16xf32> to vector<1x16xf32>
    %c8 = arith.constant 8 : index
    %c0_16 = arith.constant 0 : index
    %16 = vector.load %arg8[%c8, %c0_16] : memref<64x16xf32, #tpu.memory_space<vmem>>, vector<1x16xf32>
    tpu.vector_store %arg8[%c8, %c0_16], %15 {strides = array<i32>} : memref<64x16xf32, #tpu.memory_space<vmem>>, vector<1x16xf32>,
    %c1_17 = arith.constant 1 : index
    %c1_18 = arith.constant 1 : index
    %17 = memref.load %arg0[%c1_17, %c1_18] : memref<2x8xi32, #tpu.memory_space<smem>>
    %18 = arith.index_cast %17 : i32 to index
    %c0_19 = arith.constant 0 : index
    %c0_20 = arith.constant 0 : index
    %19 = vector.load %arg2[%18, %c0_19, %c0_20] : memref<100x1x16xf32, #tpu.memory_space<vmem>>, vector<1x1x16xf32>
    %20 = vector.shape_cast %19 : vector<1x1x16xf32> to vector<1x16xf32>
    %c9 = arith.constant 9 : index
    %c0_21 = arith.constant 0 : index
    %21 = vector.load %arg8[%c9, %c0_21] : memref<64x16xf32, #tpu.memory_space<vmem>>, vector<1x16xf32>
    tpu.vector_store %arg8[%c9, %c0_21], %20 {strides = array<i32>} : memref<64x16xf32, #tpu.memory_space<vmem>>, vector<1x16xf32>,
    %c0_22 = arith.constant 0 : index
    %c2 = arith.constant 2 : index
    %22 = memref.load %arg0[%c0_22, %c2] : memref<2x8xi32, #tpu.memory_space<smem>>
    %23 = arith.index_cast %22 : i32 to index
    %c0_23 = arith.constant 0 : index
    %c0_24 = arith.constant 0 : index
    %24 = vector.load %arg2[%23, %c0_23, %c0_24] : memref<100x1x16xf32, #tpu.memory_space<vmem>>, vector<1x1x16xf32>
    %25 = vector.shape_cast %24 : vector<1x1x16xf32> to vector<1x16xf32>
    %c16 = arith.constant 16 : index
    %c0_25 = arith.constant 0 : index
    %26 = vector.load %arg8[%c16, %c0_25] : memref<64x16xf32, #tpu.memory_space<vmem>>, vector<1x16xf32>
    tpu.vector_store %arg8[%c16, %c0_25], %25 {strides = array<i32>} : memref<64x16xf32, #tpu.memory_space<vmem>>, vector<1x16xf32>,
    %c1_26 = arith.constant 1 : index
    %c2_27 = arith.constant 2 : index
    %27 = memref.load %arg0[%c1_26, %c2_27] : memref<2x8xi32, #tpu.memory_space<smem>>
    %28 = arith.index_cast %27 : i32 to index
    %c0_28 = arith.constant 0 : index
    %c0_29 = arith.constant 0 : index
    %29 = vector.load %arg2[%28, %c0_28, %c0_29] : memref<100x1x16xf32, #tpu.memory_space<vmem>>, vector<1x1x16xf32>
    %30 = vector.shape_cast %29 : vector<1x1x16xf32> to vector<1x16xf32>
    %c17 = arith.constant 17 : index
    %c0_30 = arith.constant 0 : index
    %31 = vector.load %arg8[%c17, %c0_30] : memref<64x16xf32, #tpu.memory_space<vmem>>, vector<1x16xf32>
    tpu.vector_store %arg8[%c17, %c0_30], %30 {strides = array<i32>} : memref<64x16xf32, #tpu.memory_space<vmem>>, vector<1x16xf32>,
    %c0_31 = arith.constant 0 : index
    %c3 = arith.constant 3 : index
    %32 = memref.load %arg0[%c0_31, %c3] : memref<2x8xi32, #tpu.memory_space<smem>>
    %33 = arith.index_cast %32 : i32 to index
    %c0_32 = arith.constant 0 : index
    %c0_33 = arith.constant 0 : index
    %34 = vector.load %arg2[%33, %c0_32, %c0_33] : memref<100x1x16xf32, #tpu.memory_space<vmem>>, vector<1x1x16xf32>
    %35 = vector.shape_cast %34 : vector<1x1x16xf32> to vector<1x16xf32>
    %c24 = arith.constant 24 : index
    %c0_34 = arith.constant 0 : index
    %36 = vector.load %arg8[%c24, %c0_34] : memref<64x16xf32, #tpu.memory_space<vmem>>, vector<1x16xf32>
    tpu.vector_store %arg8[%c24, %c0_34], %35 {strides = array<i32>} : memref<64x16xf32, #tpu.memory_space<vmem>>, vector<1x16xf32>,
    %c1_35 = arith.constant 1 : index
    %c3_36 = arith.constant 3 : index
    %37 = memref.load %arg0[%c1_35, %c3_36] : memref<2x8xi32, #tpu.memory_space<smem>>
    %38 = arith.index_cast %37 : i32 to index
    %c0_37 = arith.constant 0 : index
    %c0_38 = arith.constant 0 : index
    %39 = vector.load %arg2[%38, %c0_37, %c0_38] : memref<100x1x16xf32, #tpu.memory_space<vmem>>, vector<1x1x16xf32>
    %40 = vector.shape_cast %39 : vector<1x1x16xf32> to vector<1x16xf32>
    %c25 = arith.constant 25 : index
    %c0_39 = arith.constant 0 : index
    %41 = vector.load %arg8[%c25, %c0_39] : memref<64x16xf32, #tpu.memory_space<vmem>>, vector<1x16xf32>
    tpu.vector_store %arg8[%c25, %c0_39], %40 {strides = array<i32>} : memref<64x16xf32, #tpu.memory_space<vmem>>, vector<1x16xf32>,
    %c0_40 = arith.constant 0 : index
    %c4 = arith.constant 4 : index
    %42 = memref.load %arg0[%c0_40, %c4] : memref<2x8xi32, #tpu.memory_space<smem>>
    %43 = arith.index_cast %42 : i32 to index
    %c0_41 = arith.constant 0 : index
    %c0_42 = arith.constant 0 : index
    %44 = vector.load %arg2[%43, %c0_41, %c0_42] : memref<100x1x16xf32, #tpu.memory_space<vmem>>, vector<1x1x16xf32>
    %45 = vector.shape_cast %44 : vector<1x1x16xf32> to vector<1x16xf32>
    %c32 = arith.constant 32 : index
    %c0_43 = arith.constant 0 : index
    %46 = vector.load %arg8[%c32, %c0_43] : memref<64x16xf32, #tpu.memory_space<vmem>>, vector<1x16xf32>
    tpu.vector_store %arg8[%c32, %c0_43], %45 {strides = array<i32>} : memref<64x16xf32, #tpu.memory_space<vmem>>, vector<1x16xf32>,
    %c1_44 = arith.constant 1 : index
    %c4_45 = arith.constant 4 : index
    %47 = memref.load %arg0[%c1_44, %c4_45] : memref<2x8xi32, #tpu.memory_space<smem>>
    %48 = arith.index_cast %47 : i32 to index
    %c0_46 = arith.constant 0 : index
    %c0_47 = arith.constant 0 : index
    %49 = vector.load %arg2[%48, %c0_46, %c0_47] : memref<100x1x16xf32, #tpu.memory_space<vmem>>, vector<1x1x16xf32>
    %50 = vector.shape_cast %49 : vector<1x1x16xf32> to vector<1x16xf32>
    %c33 = arith.constant 33 : index
    %c0_48 = arith.constant 0 : index
    %51 = vector.load %arg8[%c33, %c0_48] : memref<64x16xf32, #tpu.memory_space<vmem>>, vector<1x16xf32>
    tpu.vector_store %arg8[%c33, %c0_48], %50 {strides = array<i32>} : memref<64x16xf32, #tpu.memory_space<vmem>>, vector<1x16xf32>,
    %c0_49 = arith.constant 0 : index
    %c5 = arith.constant 5 : index
    %52 = memref.load %arg0[%c0_49, %c5] : memref<2x8xi32, #tpu.memory_space<smem>>
    %53 = arith.index_cast %52 : i32 to index
    %c0_50 = arith.constant 0 : index
    %c0_51 = arith.constant 0 : index
    %54 = vector.load %arg2[%53, %c0_50, %c0_51] : memref<100x1x16xf32, #tpu.memory_space<vmem>>, vector<1x1x16xf32>
    %55 = vector.shape_cast %54 : vector<1x1x16xf32> to vector<1x16xf32>
    %c40 = arith.constant 40 : index
    %c0_52 = arith.constant 0 : index
    %56 = vector.load %arg8[%c40, %c0_52] : memref<64x16xf32, #tpu.memory_space<vmem>>, vector<1x16xf32>
    tpu.vector_store %arg8[%c40, %c0_52], %55 {strides = array<i32>} : memref<64x16xf32, #tpu.memory_space<vmem>>, vector<1x16xf32>,
    %c1_53 = arith.constant 1 : index
    %c5_54 = arith.constant 5 : index
    %57 = memref.load %arg0[%c1_53, %c5_54] : memref<2x8xi32, #tpu.memory_space<smem>>
    %58 = arith.index_cast %57 : i32 to index
    %c0_55 = arith.constant 0 : index
    %c0_56 = arith.constant 0 : index
    %59 = vector.load %arg2[%58, %c0_55, %c0_56] : memref<100x1x16xf32, #tpu.memory_space<vmem>>, vector<1x1x16xf32>
    %60 = vector.shape_cast %59 : vector<1x1x16xf32> to vector<1x16xf32>
    %c41 = arith.constant 41 : index
    %c0_57 = arith.constant 0 : index
    %61 = vector.load %arg8[%c41, %c0_57] : memref<64x16xf32, #tpu.memory_space<vmem>>, vector<1x16xf32>
    tpu.vector_store %arg8[%c41, %c0_57], %60 {strides = array<i32>} : memref<64x16xf32, #tpu.memory_space<vmem>>, vector<1x16xf32>,
    %c0_58 = arith.constant 0 : index
    %c6 = arith.constant 6 : index
    %62 = memref.load %arg0[%c0_58, %c6] : memref<2x8xi32, #tpu.memory_space<smem>>
    %63 = arith.index_cast %62 : i32 to index
    %c0_59 = arith.constant 0 : index
    %c0_60 = arith.constant 0 : index
    %64 = vector.load %arg2[%63, %c0_59, %c0_60] : memref<100x1x16xf32, #tpu.memory_space<vmem>>, vector<1x1x16xf32>
    %65 = vector.shape_cast %64 : vector<1x1x16xf32> to vector<1x16xf32>
    %c48 = arith.constant 48 : index
    %c0_61 = arith.constant 0 : index
    %66 = vector.load %arg8[%c48, %c0_61] : memref<64x16xf32, #tpu.memory_space<vmem>>, vector<1x16xf32>
    tpu.vector_store %arg8[%c48, %c0_61], %65 {strides = array<i32>} : memref<64x16xf32, #tpu.memory_space<vmem>>, vector<1x16xf32>,
    %c1_62 = arith.constant 1 : index
    %c6_63 = arith.constant 6 : index
    %67 = memref.load %arg0[%c1_62, %c6_63] : memref<2x8xi32, #tpu.memory_space<smem>>
    %68 = arith.index_cast %67 : i32 to index
    %c0_64 = arith.constant 0 : index
    %c0_65 = arith.constant 0 : index
    %69 = vector.load %arg2[%68, %c0_64, %c0_65] : memref<100x1x16xf32, #tpu.memory_space<vmem>>, vector<1x1x16xf32>
    %70 = vector.shape_cast %69 : vector<1x1x16xf32> to vector<1x16xf32>
    %c49 = arith.constant 49 : index
    %c0_66 = arith.constant 0 : index
    %71 = vector.load %arg8[%c49, %c0_66] : memref<64x16xf32, #tpu.memory_space<vmem>>, vector<1x16xf32>
    tpu.vector_store %arg8[%c49, %c0_66], %70 {strides = array<i32>} : memref<64x16xf32, #tpu.memory_space<vmem>>, vector<1x16xf32>,
    %c0_67 = arith.constant 0 : index
    %c7 = arith.constant 7 : index
    %72 = memref.load %arg0[%c0_67, %c7] : memref<2x8xi32, #tpu.memory_space<smem>>
    %73 = arith.index_cast %72 : i32 to index
    %c0_68 = arith.constant 0 : index
    %c0_69 = arith.constant 0 : index
    %74 = vector.load %arg2[%73, %c0_68, %c0_69] : memref<100x1x16xf32, #tpu.memory_space<vmem>>, vector<1x1x16xf32>
    %75 = vector.shape_cast %74 : vector<1x1x16xf32> to vector<1x16xf32>
    %c56 = arith.constant 56 : index
    %c0_70 = arith.constant 0 : index
    %76 = vector.load %arg8[%c56, %c0_70] : memref<64x16xf32, #tpu.memory_space<vmem>>, vector<1x16xf32>
    tpu.vector_store %arg8[%c56, %c0_70], %75 {strides = array<i32>} : memref<64x16xf32, #tpu.memory_space<vmem>>, vector<1x16xf32>,
    %c1_71 = arith.constant 1 : index
    %c7_72 = arith.constant 7 : index
    %77 = memref.load %arg0[%c1_71, %c7_72] : memref<2x8xi32, #tpu.memory_space<smem>>
    %78 = arith.index_cast %77 : i32 to index
    %c0_73 = arith.constant 0 : index
    %c0_74 = arith.constant 0 : index
    %79 = vector.load %arg2[%78, %c0_73, %c0_74] : memref<100x1x16xf32, #tpu.memory_space<vmem>>, vector<1x1x16xf32>
    %80 = vector.shape_cast %79 : vector<1x1x16xf32> to vector<1x16xf32>
    %c57 = arith.constant 57 : index
    %c0_75 = arith.constant 0 : index
    %81 = vector.load %arg8[%c57, %c0_75] : memref<64x16xf32, #tpu.memory_space<vmem>>, vector<1x16xf32>
    tpu.vector_store %arg8[%c57, %c0_75], %80 {strides = array<i32>} : memref<64x16xf32, #tpu.memory_space<vmem>>, vector<1x16xf32>,
    %c0_76 = arith.constant 0 : index
    %c0_77 = arith.constant 0 : index
    %82 = vector.load %arg8[%c0_76, %c0_77] : memref<64x16xf32, #tpu.memory_space<vmem>>, vector<64x16xf32>
    %83 = arith.truncf %82 : vector<64x16xf32> to vector<64x16xbf16>
    %c0_78 = arith.constant 0 : index
    %c0_79 = arith.constant 0 : index
    %84 = vector.load %arg3[%c0_78, %c0_79] : memref<16x256xbf16, #tpu.memory_space<vmem>>, vector<16x256xbf16>
    %cst_80 = arith.constant dense<0.000000e+00> : vector<64x256xf32>
    %85 = tpu.matmul %83, %84, %cst_80 {dimension_numbers = #tpu.dot_dimension_numbers<[1], [0], [0], [1], [0, 0, 1, 1], [], []>} : vector<64x16xbf16>, vector<16x256xbf16>, vector<64x256xf32> -> vector<64x256xf32>
    %c0_81 = arith.constant 0 : index
    %c0_82 = arith.constant 0 : index
    %86 = vector.load %arg5[%c0_81, %c0_82] : memref<1x256xf32, #tpu.memory_space<vmem>>, vector<1x256xf32>
    %87 = vector.broadcast %86 : vector<1x256xf32> to vector<64x256xf32>
    %88 = arith.addf %85, %87 : vector<64x256xf32>
    %c0_83 = arith.constant 0 : index
    %c0_84 = arith.constant 0 : index
    %89 = vector.load %arg9[%c0_83, %c0_84] : memref<64x256xf32, #tpu.memory_space<vmem>>, vector<64x256xf32>
    tpu.vector_store %arg9[%c0_83, %c0_84], %88 {strides = array<i32>} : memref<64x256xf32, #tpu.memory_space<vmem>>, vector<64x256xf32>,
    %c0_85 = arith.constant 0 : index
    %c0_86 = arith.constant 0 : index
    %c0_87 = arith.constant 0 : index
    %90 = vector.load %arg4[%c0_85, %c0_86, %c0_87] : memref<2x32x128xbf16, #tpu.memory_space<vmem>>, vector<1x32x128xbf16>
    %91 = vector.shape_cast %90 : vector<1x32x128xbf16> to vector<32x128xbf16>
    %c1_88 = arith.constant 1 : index
    %c0_89 = arith.constant 0 : index
    %c0_90 = arith.constant 0 : index
    %92 = vector.load %arg4[%c1_88, %c0_89, %c0_90] : memref<2x32x128xbf16, #tpu.memory_space<vmem>>, vector<1x32x128xbf16>
    %93 = vector.shape_cast %92 : vector<1x32x128xbf16> to vector<32x128xbf16>
    %c0_91 = arith.constant 0 : index
    %c0_92 = arith.constant 0 : index
    %c0_93 = arith.constant 0 : index
    %94 = vector.load %arg1[%c0_91, %c0_92, %c0_93] : memref<2x2x32xf32, #tpu.memory_space<vmem>>, vector<1x2x32xf32>
    %95 = vector.shape_cast %94 : vector<1x2x32xf32> to vector<2x32xf32>
    %cst_94 = arith.constant 0.000000e+00 : f32
    %96 = vector.broadcast %cst_94 : f32 to vector<6x32xf32>
    %97 = tpu.concatenate %95, %96 in 0 : vector<2x32xf32>, vector<6x32xf32> -> vector<8x32xf32>
    %c1_95 = arith.constant 1 : index
    %c0_96 = arith.constant 0 : index
    %c0_97 = arith.constant 0 : index
    %98 = vector.load %arg1[%c1_95, %c0_96, %c0_97] : memref<2x2x32xf32, #tpu.memory_space<vmem>>, vector<1x2x32xf32>
    %99 = vector.shape_cast %98 : vector<1x2x32xf32> to vector<2x32xf32>
    %cst_98 = arith.constant 0.000000e+00 : f32
    %100 = vector.broadcast %cst_98 : f32 to vector<6x32xf32>
    %101 = tpu.concatenate %99, %100 in 0 : vector<2x32xf32>, vector<6x32xf32> -> vector<8x32xf32>
    %cst_99 = arith.constant 0.000000e+00 : f32
    %102 = vector.broadcast %cst_99 : f32 to vector<8x32xf32>
    %cst_100 = arith.constant 0.000000e+00 : f32
    %103 = vector.broadcast %cst_100 : f32 to vector<8x32xf32>
    %104 = arith.truncf %97 : vector<8x32xf32> to vector<8x32xbf16>
    %cst_101 = arith.constant dense<0.000000e+00> : vector<8x128xf32>
    %105 = tpu.matmul %104, %91, %cst_101 {dimension_numbers = #tpu.dot_dimension_numbers<[1], [0], [0], [1], [0, 0, 1, 1], [], []>} : vector<8x32xbf16>, vector<32x128xbf16>, vector<8x128xf32> -> vector<8x128xf32>
    %106 = arith.truncf %101 : vector<8x32xf32> to vector<8x32xbf16>
    %cst_102 = arith.constant dense<0.000000e+00> : vector<8x128xf32>
    %107 = tpu.matmul %106, %93, %cst_102 {dimension_numbers = #tpu.dot_dimension_numbers<[1], [0], [0], [1], [0, 0, 1, 1], [], []>} : vector<8x32xbf16>, vector<32x128xbf16>, vector<8x128xf32> -> vector<8x128xf32>
    %c0_103 = arith.constant 0 : index
    %c0_104 = arith.constant 0 : index
    %108 = vector.load %arg9[%c0_103, %c0_104] : memref<64x256xf32, #tpu.memory_space<vmem>>, vector<8x128xf32>
    %109 = arith.addf %108, %105 : vector<8x128xf32>
    %c56_105 = arith.constant 56 : index
    %c128 = arith.constant 128 : index
    %110 = vector.load %arg9[%c56_105, %c128] : memref<64x256xf32, #tpu.memory_space<vmem>>, vector<8x128xf32>
    %111 = arith.addf %110, %107 : vector<8x128xf32>
    %112 = arith.negf %109 : vector<8x128xf32>
    %113 = math.exp %112 : vector<8x128xf32>
    %cst_106 = arith.constant 1.000000e+00 : f32
    %114 = vector.broadcast %cst_106 : f32 to vector<8x128xf32>
    %115 = arith.addf %114, %113 : vector<8x128xf32>
    %116 = arith.divf %114, %115 : vector<8x128xf32>
    %117 = math.tanh %109 : vector<8x128xf32>
    %118 = vector.extract_strided_slice %116 {offsets = [0, 0], sizes = [8, 32], strides = [1, 1]} : vector<8x128xf32> to vector<8x32xf32>
    %119 = vector.extract_strided_slice %116 {offsets = [0, 32], sizes = [8, 32], strides = [1, 1]} : vector<8x128xf32> to vector<8x32xf32>
    %120 = vector.extract_strided_slice %117 {offsets = [0, 64], sizes = [8, 32], strides = [1, 1]} : vector<8x128xf32> to vector<8x32xf32>
    %121 = vector.extract_strided_slice %116 {offsets = [0, 96], sizes = [8, 32], strides = [1, 1]} : vector<8x128xf32> to vector<8x32xf32>
    %122 = arith.mulf %119, %102 : vector<8x32xf32>
    %123 = arith.mulf %118, %120 : vector<8x32xf32>
    %124 = arith.addf %122, %123 : vector<8x32xf32>
    %125 = math.tanh %124 : vector<8x32xf32>
    %126 = arith.mulf %121, %125 : vector<8x32xf32>
    %127 = arith.negf %111 : vector<8x128xf32>
    %128 = math.exp %127 : vector<8x128xf32>
    %cst_107 = arith.constant 1.000000e+00 : f32
    %129 = vector.broadcast %cst_107 : f32 to vector<8x128xf32>
    %130 = arith.addf %129, %128 : vector<8x128xf32>
    %131 = arith.divf %129, %130 : vector<8x128xf32>
    %132 = math.tanh %111 : vector<8x128xf32>
    %133 = vector.extract_strided_slice %131 {offsets = [0, 0], sizes = [8, 32], strides = [1, 1]} : vector<8x128xf32> to vector<8x32xf32>
    %134 = vector.extract_strided_slice %131 {offsets = [0, 32], sizes = [8, 32], strides = [1, 1]} : vector<8x128xf32> to vector<8x32xf32>
    %135 = vector.extract_strided_slice %132 {offsets = [0, 64], sizes = [8, 32], strides = [1, 1]} : vector<8x128xf32> to vector<8x32xf32>
    %136 = vector.extract_strided_slice %131 {offsets = [0, 96], sizes = [8, 32], strides = [1, 1]} : vector<8x128xf32> to vector<8x32xf32>
    %137 = arith.mulf %134, %103 : vector<8x32xf32>
    %138 = arith.mulf %133, %135 : vector<8x32xf32>
    %139 = arith.addf %137, %138 : vector<8x32xf32>
    %140 = math.tanh %139 : vector<8x32xf32>
    %141 = arith.mulf %136, %140 : vector<8x32xf32>
    %142 = vector.extract_strided_slice %126 {offsets = [0, 0], sizes = [1, 32], strides = [1, 1]} : vector<8x32xf32> to vector<1x32xf32>
    %c0_108 = arith.constant 0 : index
    %c0_109 = arith.constant 0 : index
    %c0_110 = arith.constant 0 : index
    %143 = vector.load %arg6[%c0_108, %c0_109, %c0_110] : memref<2x8x64xf32, #tpu.memory_space<vmem>>, vector<1x1x32xf32>
    %144 = vector.shape_cast %143 : vector<1x1x32xf32> to vector<1x32xf32>
    %145 = vector.shape_cast %142 : vector<1x32xf32> to vector<1x1x32xf32>
    tpu.vector_store %arg6[%c0_108, %c0_109, %c0_110], %145 {strides = array<i32>} : memref<2x8x64xf32, #tpu.memory_space<vmem>>, vector<1x1x32xf32>,
    %146 = vector.extract_strided_slice %141 {offsets = [0, 0], sizes = [1, 32], strides = [1, 1]} : vector<8x32xf32> to vector<1x32xf32>
    %c0_111 = arith.constant 0 : index
    %c7_112 = arith.constant 7 : index
    %c32_113 = arith.constant 32 : index
    %147 = vector.load %arg6[%c0_111, %c7_112, %c32_113] : memref<2x8x64xf32, #tpu.memory_space<vmem>>, vector<1x1x32xf32>
    %148 = vector.shape_cast %147 : vector<1x1x32xf32> to vector<1x32xf32>
    %149 = vector.shape_cast %146 : vector<1x32xf32> to vector<1x1x32xf32>
    tpu.vector_store %arg6[%c0_111, %c7_112, %c32_113], %149 {strides = array<i32>} : memref<2x8x64xf32, #tpu.memory_space<vmem>>, vector<1x1x32xf32>,
    %150 = vector.extract_strided_slice %126 {offsets = [1, 0], sizes = [1, 32], strides = [1, 1]} : vector<8x32xf32> to vector<1x32xf32>
    %c1_114 = arith.constant 1 : index
    %c0_115 = arith.constant 0 : index
    %c0_116 = arith.constant 0 : index
    %151 = vector.load %arg6[%c1_114, %c0_115, %c0_116] : memref<2x8x64xf32, #tpu.memory_space<vmem>>, vector<1x1x32xf32>
    %152 = vector.shape_cast %151 : vector<1x1x32xf32> to vector<1x32xf32>
    %153 = vector.shape_cast %150 : vector<1x32xf32> to vector<1x1x32xf32>
    tpu.vector_store %arg6[%c1_114, %c0_115, %c0_116], %153 {strides = array<i32>} : memref<2x8x64xf32, #tpu.memory_space<vmem>>, vector<1x1x32xf32>,
    %154 = vector.extract_strided_slice %141 {offsets = [1, 0], sizes = [1, 32], strides = [1, 1]} : vector<8x32xf32> to vector<1x32xf32>
    %c1_117 = arith.constant 1 : index
    %c7_118 = arith.constant 7 : index
    %c32_119 = arith.constant 32 : index
    %155 = vector.load %arg6[%c1_117, %c7_118, %c32_119] : memref<2x8x64xf32, #tpu.memory_space<vmem>>, vector<1x1x32xf32>
    %156 = vector.shape_cast %155 : vector<1x1x32xf32> to vector<1x32xf32>
    %157 = vector.shape_cast %154 : vector<1x32xf32> to vector<1x1x32xf32>
    tpu.vector_store %arg6[%c1_117, %c7_118, %c32_119], %157 {strides = array<i32>} : memref<2x8x64xf32, #tpu.memory_space<vmem>>, vector<1x1x32xf32>,
    %158 = arith.truncf %126 : vector<8x32xf32> to vector<8x32xbf16>
    %cst_120 = arith.constant dense<0.000000e+00> : vector<8x128xf32>
    %159 = tpu.matmul %158, %91, %cst_120 {dimension_numbers = #tpu.dot_dimension_numbers<[1], [0], [0], [1], [0, 0, 1, 1], [], []>} : vector<8x32xbf16>, vector<32x128xbf16>, vector<8x128xf32> -> vector<8x128xf32>
    %160 = arith.truncf %141 : vector<8x32xf32> to vector<8x32xbf16>
    %cst_121 = arith.constant dense<0.000000e+00> : vector<8x128xf32>
    %161 = tpu.matmul %160, %93, %cst_121 {dimension_numbers = #tpu.dot_dimension_numbers<[1], [0], [0], [1], [0, 0, 1, 1], [], []>} : vector<8x32xbf16>, vector<32x128xbf16>, vector<8x128xf32> -> vector<8x128xf32>
    %c8_122 = arith.constant 8 : index
    %c0_123 = arith.constant 0 : index
    %162 = vector.load %arg9[%c8_122, %c0_123] : memref<64x256xf32, #tpu.memory_space<vmem>>, vector<8x128xf32>
    %163 = arith.addf %162, %159 : vector<8x128xf32>
    %c48_124 = arith.constant 48 : index
    %c128_125 = arith.constant 128 : index
    %164 = vector.load %arg9[%c48_124, %c128_125] : memref<64x256xf32, #tpu.memory_space<vmem>>, vector<8x128xf32>
    %165 = arith.addf %164, %161 : vector<8x128xf32>
    %166 = arith.negf %163 : vector<8x128xf32>
    %167 = math.exp %166 : vector<8x128xf32>
    %cst_126 = arith.constant 1.000000e+00 : f32
    %168 = vector.broadcast %cst_126 : f32 to vector<8x128xf32>
    %169 = arith.addf %168, %167 : vector<8x128xf32>
    %170 = arith.divf %168, %169 : vector<8x128xf32>
    %171 = math.tanh %163 : vector<8x128xf32>
    %172 = vector.extract_strided_slice %170 {offsets = [0, 0], sizes = [8, 32], strides = [1, 1]} : vector<8x128xf32> to vector<8x32xf32>
    %173 = vector.extract_strided_slice %170 {offsets = [0, 32], sizes = [8, 32], strides = [1, 1]} : vector<8x128xf32> to vector<8x32xf32>
    %174 = vector.extract_strided_slice %171 {offsets = [0, 64], sizes = [8, 32], strides = [1, 1]} : vector<8x128xf32> to vector<8x32xf32>
    %175 = vector.extract_strided_slice %170 {offsets = [0, 96], sizes = [8, 32], strides = [1, 1]} : vector<8x128xf32> to vector<8x32xf32>
    %176 = arith.mulf %173, %124 : vector<8x32xf32>
    %177 = arith.mulf %172, %174 : vector<8x32xf32>
    %178 = arith.addf %176, %177 : vector<8x32xf32>
    %179 = math.tanh %178 : vector<8x32xf32>
    %180 = arith.mulf %175, %179 : vector<8x32xf32>
    %181 = arith.negf %165 : vector<8x128xf32>
    %182 = math.exp %181 : vector<8x128xf32>
    %cst_127 = arith.constant 1.000000e+00 : f32
    %183 = vector.broadcast %cst_127 : f32 to vector<8x128xf32>
    %184 = arith.addf %183, %182 : vector<8x128xf32>
    %185 = arith.divf %183, %184 : vector<8x128xf32>
    %186 = math.tanh %165 : vector<8x128xf32>
    %187 = vector.extract_strided_slice %185 {offsets = [0, 0], sizes = [8, 32], strides = [1, 1]} : vector<8x128xf32> to vector<8x32xf32>
    %188 = vector.extract_strided_slice %185 {offsets = [0, 32], sizes = [8, 32], strides = [1, 1]} : vector<8x128xf32> to vector<8x32xf32>
    %189 = vector.extract_strided_slice %186 {offsets = [0, 64], sizes = [8, 32], strides = [1, 1]} : vector<8x128xf32> to vector<8x32xf32>
    %190 = vector.extract_strided_slice %185 {offsets = [0, 96], sizes = [8, 32], strides = [1, 1]} : vector<8x128xf32> to vector<8x32xf32>
    %191 = arith.mulf %188, %139 : vector<8x32xf32>
    %192 = arith.mulf %187, %189 : vector<8x32xf32>
    %193 = arith.addf %191, %192 : vector<8x32xf32>
    %194 = math.tanh %193 : vector<8x32xf32>
    %195 = arith.mulf %190, %194 : vector<8x32xf32>
    %196 = vector.extract_strided_slice %180 {offsets = [0, 0], sizes = [1, 32], strides = [1, 1]} : vector<8x32xf32> to vector<1x32xf32>
    %c0_128 = arith.constant 0 : index
    %c1_129 = arith.constant 1 : index
    %c0_130 = arith.constant 0 : index
    %197 = vector.load %arg6[%c0_128, %c1_129, %c0_130] : memref<2x8x64xf32, #tpu.memory_space<vmem>>, vector<1x1x32xf32>
    %198 = vector.shape_cast %197 : vector<1x1x32xf32> to vector<1x32xf32>
    %199 = vector.shape_cast %196 : vector<1x32xf32> to vector<1x1x32xf32>
    tpu.vector_store %arg6[%c0_128, %c1_129, %c0_130], %199 {strides = array<i32>} : memref<2x8x64xf32, #tpu.memory_space<vmem>>, vector<1x1x32xf32>,
    %200 = vector.extract_strided_slice %195 {offsets = [0, 0], sizes = [1, 32], strides = [1, 1]} : vector<8x32xf32> to vector<1x32xf32>
    %c0_131 = arith.constant 0 : index
    %c6_132 = arith.constant 6 : index
    %c32_133 = arith.constant 32 : index
    %201 = vector.load %arg6[%c0_131, %c6_132, %c32_133] : memref<2x8x64xf32, #tpu.memory_space<vmem>>, vector<1x1x32xf32>
    %202 = vector.shape_cast %201 : vector<1x1x32xf32> to vector<1x32xf32>
    %203 = vector.shape_cast %200 : vector<1x32xf32> to vector<1x1x32xf32>
    tpu.vector_store %arg6[%c0_131, %c6_132, %c32_133], %203 {strides = array<i32>} : memref<2x8x64xf32, #tpu.memory_space<vmem>>, vector<1x1x32xf32>,
    %204 = vector.extract_strided_slice %180 {offsets = [1, 0], sizes = [1, 32], strides = [1, 1]} : vector<8x32xf32> to vector<1x32xf32>
    %c1_134 = arith.constant 1 : index
    %c1_135 = arith.constant 1 : index
    %c0_136 = arith.constant 0 : index
    %205 = vector.load %arg6[%c1_134, %c1_135, %c0_136] : memref<2x8x64xf32, #tpu.memory_space<vmem>>, vector<1x1x32xf32>
    %206 = vector.shape_cast %205 : vector<1x1x32xf32> to vector<1x32xf32>
    %207 = vector.shape_cast %204 : vector<1x32xf32> to vector<1x1x32xf32>
    tpu.vector_store %arg6[%c1_134, %c1_135, %c0_136], %207 {strides = array<i32>} : memref<2x8x64xf32, #tpu.memory_space<vmem>>, vector<1x1x32xf32>,
    %208 = vector.extract_strided_slice %195 {offsets = [1, 0], sizes = [1, 32], strides = [1, 1]} : vector<8x32xf32> to vector<1x32xf32>
    %c1_137 = arith.constant 1 : index
    %c6_138 = arith.constant 6 : index
    %c32_139 = arith.constant 32 : index
    %209 = vector.load %arg6[%c1_137, %c6_138, %c32_139] : memref<2x8x64xf32, #tpu.memory_space<vmem>>, vector<1x1x32xf32>
    %210 = vector.shape_cast %209 : vector<1x1x32xf32> to vector<1x32xf32>
    %211 = vector.shape_cast %208 : vector<1x32xf32> to vector<1x1x32xf32>
    tpu.vector_store %arg6[%c1_137, %c6_138, %c32_139], %211 {strides = array<i32>} : memref<2x8x64xf32, #tpu.memory_space<vmem>>, vector<1x1x32xf32>,
    %212 = arith.truncf %180 : vector<8x32xf32> to vector<8x32xbf16>
    %cst_140 = arith.constant dense<0.000000e+00> : vector<8x128xf32>
    %213 = tpu.matmul %212, %91, %cst_140 {dimension_numbers = #tpu.dot_dimension_numbers<[1], [0], [0], [1], [0, 0, 1, 1], [], []>} : vector<8x32xbf16>, vector<32x128xbf16>, vector<8x128xf32> -> vector<8x128xf32>
    %214 = arith.truncf %195 : vector<8x32xf32> to vector<8x32xbf16>
    %cst_141 = arith.constant dense<0.000000e+00> : vector<8x128xf32>
    %215 = tpu.matmul %214, %93, %cst_141 {dimension_numbers = #tpu.dot_dimension_numbers<[1], [0], [0], [1], [0, 0, 1, 1], [], []>} : vector<8x32xbf16>, vector<32x128xbf16>, vector<8x128xf32> -> vector<8x128xf32>
    %c16_142 = arith.constant 16 : index
    %c0_143 = arith.constant 0 : index
    %216 = vector.load %arg9[%c16_142, %c0_143] : memref<64x256xf32, #tpu.memory_space<vmem>>, vector<8x128xf32>
    %217 = arith.addf %216, %213 : vector<8x128xf32>
    %c40_144 = arith.constant 40 : index
    %c128_145 = arith.constant 128 : index
    %218 = vector.load %arg9[%c40_144, %c128_145] : memref<64x256xf32, #tpu.memory_space<vmem>>, vector<8x128xf32>
    %219 = arith.addf %218, %215 : vector<8x128xf32>
    %220 = arith.negf %217 : vector<8x128xf32>
    %221 = math.exp %220 : vector<8x128xf32>
    %cst_146 = arith.constant 1.000000e+00 : f32
    %222 = vector.broadcast %cst_146 : f32 to vector<8x128xf32>
    %223 = arith.addf %222, %221 : vector<8x128xf32>
    %224 = arith.divf %222, %223 : vector<8x128xf32>
    %225 = math.tanh %217 : vector<8x128xf32>
    %226 = vector.extract_strided_slice %224 {offsets = [0, 0], sizes = [8, 32], strides = [1, 1]} : vector<8x128xf32> to vector<8x32xf32>
    %227 = vector.extract_strided_slice %224 {offsets = [0, 32], sizes = [8, 32], strides = [1, 1]} : vector<8x128xf32> to vector<8x32xf32>
    %228 = vector.extract_strided_slice %225 {offsets = [0, 64], sizes = [8, 32], strides = [1, 1]} : vector<8x128xf32> to vector<8x32xf32>
    %229 = vector.extract_strided_slice %224 {offsets = [0, 96], sizes = [8, 32], strides = [1, 1]} : vector<8x128xf32> to vector<8x32xf32>
    %230 = arith.mulf %227, %178 : vector<8x32xf32>
    %231 = arith.mulf %226, %228 : vector<8x32xf32>
    %232 = arith.addf %230, %231 : vector<8x32xf32>
    %233 = math.tanh %232 : vector<8x32xf32>
    %234 = arith.mulf %229, %233 : vector<8x32xf32>
    %235 = arith.negf %219 : vector<8x128xf32>
    %236 = math.exp %235 : vector<8x128xf32>
    %cst_147 = arith.constant 1.000000e+00 : f32
    %237 = vector.broadcast %cst_147 : f32 to vector<8x128xf32>
    %238 = arith.addf %237, %236 : vector<8x128xf32>
    %239 = arith.divf %237, %238 : vector<8x128xf32>
    %240 = math.tanh %219 : vector<8x128xf32>
    %241 = vector.extract_strided_slice %239 {offsets = [0, 0], sizes = [8, 32], strides = [1, 1]} : vector<8x128xf32> to vector<8x32xf32>
    %242 = vector.extract_strided_slice %239 {offsets = [0, 32], sizes = [8, 32], strides = [1, 1]} : vector<8x128xf32> to vector<8x32xf32>
    %243 = vector.extract_strided_slice %240 {offsets = [0, 64], sizes = [8, 32], strides = [1, 1]} : vector<8x128xf32> to vector<8x32xf32>
    %244 = vector.extract_strided_slice %239 {offsets = [0, 96], sizes = [8, 32], strides = [1, 1]} : vector<8x128xf32> to vector<8x32xf32>
    %245 = arith.mulf %242, %193 : vector<8x32xf32>
    %246 = arith.mulf %241, %243 : vector<8x32xf32>
    %247 = arith.addf %245, %246 : vector<8x32xf32>
    %248 = math.tanh %247 : vector<8x32xf32>
    %249 = arith.mulf %244, %248 : vector<8x32xf32>
    %250 = vector.extract_strided_slice %234 {offsets = [0, 0], sizes = [1, 32], strides = [1, 1]} : vector<8x32xf32> to vector<1x32xf32>
    %c0_148 = arith.constant 0 : index
    %c2_149 = arith.constant 2 : index
    %c0_150 = arith.constant 0 : index
    %251 = vector.load %arg6[%c0_148, %c2_149, %c0_150] : memref<2x8x64xf32, #tpu.memory_space<vmem>>, vector<1x1x32xf32>
    %252 = vector.shape_cast %251 : vector<1x1x32xf32> to vector<1x32xf32>
    %253 = vector.shape_cast %250 : vector<1x32xf32> to vector<1x1x32xf32>
    tpu.vector_store %arg6[%c0_148, %c2_149, %c0_150], %253 {strides = array<i32>} : memref<2x8x64xf32, #tpu.memory_space<vmem>>, vector<1x1x32xf32>,
    %254 = vector.extract_strided_slice %249 {offsets = [0, 0], sizes = [1, 32], strides = [1, 1]} : vector<8x32xf32> to vector<1x32xf32>
    %c0_151 = arith.constant 0 : index
    %c5_152 = arith.constant 5 : index
    %c32_153 = arith.constant 32 : index
    %255 = vector.load %arg6[%c0_151, %c5_152, %c32_153] : memref<2x8x64xf32, #tpu.memory_space<vmem>>, vector<1x1x32xf32>
    %256 = vector.shape_cast %255 : vector<1x1x32xf32> to vector<1x32xf32>
    %257 = vector.shape_cast %254 : vector<1x32xf32> to vector<1x1x32xf32>
    tpu.vector_store %arg6[%c0_151, %c5_152, %c32_153], %257 {strides = array<i32>} : memref<2x8x64xf32, #tpu.memory_space<vmem>>, vector<1x1x32xf32>,
    %258 = vector.extract_strided_slice %234 {offsets = [1, 0], sizes = [1, 32], strides = [1, 1]} : vector<8x32xf32> to vector<1x32xf32>
    %c1_154 = arith.constant 1 : index
    %c2_155 = arith.constant 2 : index
    %c0_156 = arith.constant 0 : index
    %259 = vector.load %arg6[%c1_154, %c2_155, %c0_156] : memref<2x8x64xf32, #tpu.memory_space<vmem>>, vector<1x1x32xf32>
    %260 = vector.shape_cast %259 : vector<1x1x32xf32> to vector<1x32xf32>
    %261 = vector.shape_cast %258 : vector<1x32xf32> to vector<1x1x32xf32>
    tpu.vector_store %arg6[%c1_154, %c2_155, %c0_156], %261 {strides = array<i32>} : memref<2x8x64xf32, #tpu.memory_space<vmem>>, vector<1x1x32xf32>,
    %262 = vector.extract_strided_slice %249 {offsets = [1, 0], sizes = [1, 32], strides = [1, 1]} : vector<8x32xf32> to vector<1x32xf32>
    %c1_157 = arith.constant 1 : index
    %c5_158 = arith.constant 5 : index
    %c32_159 = arith.constant 32 : index
    %263 = vector.load %arg6[%c1_157, %c5_158, %c32_159] : memref<2x8x64xf32, #tpu.memory_space<vmem>>, vector<1x1x32xf32>
    %264 = vector.shape_cast %263 : vector<1x1x32xf32> to vector<1x32xf32>
    %265 = vector.shape_cast %262 : vector<1x32xf32> to vector<1x1x32xf32>
    tpu.vector_store %arg6[%c1_157, %c5_158, %c32_159], %265 {strides = array<i32>} : memref<2x8x64xf32, #tpu.memory_space<vmem>>, vector<1x1x32xf32>,
    %266 = arith.truncf %234 : vector<8x32xf32> to vector<8x32xbf16>
    %cst_160 = arith.constant dense<0.000000e+00> : vector<8x128xf32>
    %267 = tpu.matmul %266, %91, %cst_160 {dimension_numbers = #tpu.dot_dimension_numbers<[1], [0], [0], [1], [0, 0, 1, 1], [], []>} : vector<8x32xbf16>, vector<32x128xbf16>, vector<8x128xf32> -> vector<8x128xf32>
    %268 = arith.truncf %249 : vector<8x32xf32> to vector<8x32xbf16>
    %cst_161 = arith.constant dense<0.000000e+00> : vector<8x128xf32>
    %269 = tpu.matmul %268, %93, %cst_161 {dimension_numbers = #tpu.dot_dimension_numbers<[1], [0], [0], [1], [0, 0, 1, 1], [], []>} : vector<8x32xbf16>, vector<32x128xbf16>, vector<8x128xf32> -> vector<8x128xf32>
    %c24_162 = arith.constant 24 : index
    %c0_163 = arith.constant 0 : index
    %270 = vector.load %arg9[%c24_162, %c0_163] : memref<64x256xf32, #tpu.memory_space<vmem>>, vector<8x128xf32>
    %271 = arith.addf %270, %267 : vector<8x128xf32>
    %c32_164 = arith.constant 32 : index
    %c128_165 = arith.constant 128 : index
    %272 = vector.load %arg9[%c32_164, %c128_165] : memref<64x256xf32, #tpu.memory_space<vmem>>, vector<8x128xf32>
    %273 = arith.addf %272, %269 : vector<8x128xf32>
    %274 = arith.negf %271 : vector<8x128xf32>
    %275 = math.exp %274 : vector<8x128xf32>
    %cst_166 = arith.constant 1.000000e+00 : f32
    %276 = vector.broadcast %cst_166 : f32 to vector<8x128xf32>
    %277 = arith.addf %276, %275 : vector<8x128xf32>
    %278 = arith.divf %276, %277 : vector<8x128xf32>
    %279 = math.tanh %271 : vector<8x128xf32>
    %280 = vector.extract_strided_slice %278 {offsets = [0, 0], sizes = [8, 32], strides = [1, 1]} : vector<8x128xf32> to vector<8x32xf32>
    %281 = vector.extract_strided_slice %278 {offsets = [0, 32], sizes = [8, 32], strides = [1, 1]} : vector<8x128xf32> to vector<8x32xf32>
    %282 = vector.extract_strided_slice %279 {offsets = [0, 64], sizes = [8, 32], strides = [1, 1]} : vector<8x128xf32> to vector<8x32xf32>
    %283 = vector.extract_strided_slice %278 {offsets = [0, 96], sizes = [8, 32], strides = [1, 1]} : vector<8x128xf32> to vector<8x32xf32>
    %284 = arith.mulf %281, %232 : vector<8x32xf32>
    %285 = arith.mulf %280, %282 : vector<8x32xf32>
    %286 = arith.addf %284, %285 : vector<8x32xf32>
    %287 = math.tanh %286 : vector<8x32xf32>
    %288 = arith.mulf %283, %287 : vector<8x32xf32>
    %289 = arith.negf %273 : vector<8x128xf32>
    %290 = math.exp %289 : vector<8x128xf32>
    %cst_167 = arith.constant 1.000000e+00 : f32
    %291 = vector.broadcast %cst_167 : f32 to vector<8x128xf32>
    %292 = arith.addf %291, %290 : vector<8x128xf32>
    %293 = arith.divf %291, %292 : vector<8x128xf32>
    %294 = math.tanh %273 : vector<8x128xf32>
    %295 = vector.extract_strided_slice %293 {offsets = [0, 0], sizes = [8, 32], strides = [1, 1]} : vector<8x128xf32> to vector<8x32xf32>
    %296 = vector.extract_strided_slice %293 {offsets = [0, 32], sizes = [8, 32], strides = [1, 1]} : vector<8x128xf32> to vector<8x32xf32>
    %297 = vector.extract_strided_slice %294 {offsets = [0, 64], sizes = [8, 32], strides = [1, 1]} : vector<8x128xf32> to vector<8x32xf32>
    %298 = vector.extract_strided_slice %293 {offsets = [0, 96], sizes = [8, 32], strides = [1, 1]} : vector<8x128xf32> to vector<8x32xf32>
    %299 = arith.mulf %296, %247 : vector<8x32xf32>
    %300 = arith.mulf %295, %297 : vector<8x32xf32>
    %301 = arith.addf %299, %300 : vector<8x32xf32>
    %302 = math.tanh %301 : vector<8x32xf32>
    %303 = arith.mulf %298, %302 : vector<8x32xf32>
    %304 = vector.extract_strided_slice %288 {offsets = [0, 0], sizes = [1, 32], strides = [1, 1]} : vector<8x32xf32> to vector<1x32xf32>
    %c0_168 = arith.constant 0 : index
    %c3_169 = arith.constant 3 : index
    %c0_170 = arith.constant 0 : index
    %305 = vector.load %arg6[%c0_168, %c3_169, %c0_170] : memref<2x8x64xf32, #tpu.memory_space<vmem>>, vector<1x1x32xf32>
    %306 = vector.shape_cast %305 : vector<1x1x32xf32> to vector<1x32xf32>
    %307 = vector.shape_cast %304 : vector<1x32xf32> to vector<1x1x32xf32>
    tpu.vector_store %arg6[%c0_168, %c3_169, %c0_170], %307 {strides = array<i32>} : memref<2x8x64xf32, #tpu.memory_space<vmem>>, vector<1x1x32xf32>,
    %308 = vector.extract_strided_slice %303 {offsets = [0, 0], sizes = [1, 32], strides = [1, 1]} : vector<8x32xf32> to vector<1x32xf32>
    %c0_171 = arith.constant 0 : index
    %c4_172 = arith.constant 4 : index
    %c32_173 = arith.constant 32 : index
    %309 = vector.load %arg6[%c0_171, %c4_172, %c32_173] : memref<2x8x64xf32, #tpu.memory_space<vmem>>, vector<1x1x32xf32>
    %310 = vector.shape_cast %309 : vector<1x1x32xf32> to vector<1x32xf32>
    %311 = vector.shape_cast %308 : vector<1x32xf32> to vector<1x1x32xf32>
    tpu.vector_store %arg6[%c0_171, %c4_172, %c32_173], %311 {strides = array<i32>} : memref<2x8x64xf32, #tpu.memory_space<vmem>>, vector<1x1x32xf32>,
    %312 = vector.extract_strided_slice %288 {offsets = [1, 0], sizes = [1, 32], strides = [1, 1]} : vector<8x32xf32> to vector<1x32xf32>
    %c1_174 = arith.constant 1 : index
    %c3_175 = arith.constant 3 : index
    %c0_176 = arith.constant 0 : index
    %313 = vector.load %arg6[%c1_174, %c3_175, %c0_176] : memref<2x8x64xf32, #tpu.memory_space<vmem>>, vector<1x1x32xf32>
    %314 = vector.shape_cast %313 : vector<1x1x32xf32> to vector<1x32xf32>
    %315 = vector.shape_cast %312 : vector<1x32xf32> to vector<1x1x32xf32>
    tpu.vector_store %arg6[%c1_174, %c3_175, %c0_176], %315 {strides = array<i32>} : memref<2x8x64xf32, #tpu.memory_space<vmem>>, vector<1x1x32xf32>,
    %316 = vector.extract_strided_slice %303 {offsets = [1, 0], sizes = [1, 32], strides = [1, 1]} : vector<8x32xf32> to vector<1x32xf32>
    %c1_177 = arith.constant 1 : index
    %c4_178 = arith.constant 4 : index
    %c32_179 = arith.constant 32 : index
    %317 = vector.load %arg6[%c1_177, %c4_178, %c32_179] : memref<2x8x64xf32, #tpu.memory_space<vmem>>, vector<1x1x32xf32>
    %318 = vector.shape_cast %317 : vector<1x1x32xf32> to vector<1x32xf32>
    %319 = vector.shape_cast %316 : vector<1x32xf32> to vector<1x1x32xf32>
    tpu.vector_store %arg6[%c1_177, %c4_178, %c32_179], %319 {strides = array<i32>} : memref<2x8x64xf32, #tpu.memory_space<vmem>>, vector<1x1x32xf32>,
    %320 = arith.truncf %288 : vector<8x32xf32> to vector<8x32xbf16>
    %cst_180 = arith.constant dense<0.000000e+00> : vector<8x128xf32>
    %321 = tpu.matmul %320, %91, %cst_180 {dimension_numbers = #tpu.dot_dimension_numbers<[1], [0], [0], [1], [0, 0, 1, 1], [], []>} : vector<8x32xbf16>, vector<32x128xbf16>, vector<8x128xf32> -> vector<8x128xf32>
    %322 = arith.truncf %303 : vector<8x32xf32> to vector<8x32xbf16>
    %cst_181 = arith.constant dense<0.000000e+00> : vector<8x128xf32>
    %323 = tpu.matmul %322, %93, %cst_181 {dimension_numbers = #tpu.dot_dimension_numbers<[1], [0], [0], [1], [0, 0, 1, 1], [], []>} : vector<8x32xbf16>, vector<32x128xbf16>, vector<8x128xf32> -> vector<8x128xf32>
    %c32_182 = arith.constant 32 : index
    %c0_183 = arith.constant 0 : index
    %324 = vector.load %arg9[%c32_182, %c0_183] : memref<64x256xf32, #tpu.memory_space<vmem>>, vector<8x128xf32>
    %325 = arith.addf %324, %321 : vector<8x128xf32>
    %c24_184 = arith.constant 24 : index
    %c128_185 = arith.constant 128 : index
    %326 = vector.load %arg9[%c24_184, %c128_185] : memref<64x256xf32, #tpu.memory_space<vmem>>, vector<8x128xf32>
    %327 = arith.addf %326, %323 : vector<8x128xf32>
    %328 = arith.negf %325 : vector<8x128xf32>
    %329 = math.exp %328 : vector<8x128xf32>
    %cst_186 = arith.constant 1.000000e+00 : f32
    %330 = vector.broadcast %cst_186 : f32 to vector<8x128xf32>
    %331 = arith.addf %330, %329 : vector<8x128xf32>
    %332 = arith.divf %330, %331 : vector<8x128xf32>
    %333 = math.tanh %325 : vector<8x128xf32>
    %334 = vector.extract_strided_slice %332 {offsets = [0, 0], sizes = [8, 32], strides = [1, 1]} : vector<8x128xf32> to vector<8x32xf32>
    %335 = vector.extract_strided_slice %332 {offsets = [0, 32], sizes = [8, 32], strides = [1, 1]} : vector<8x128xf32> to vector<8x32xf32>
    %336 = vector.extract_strided_slice %333 {offsets = [0, 64], sizes = [8, 32], strides = [1, 1]} : vector<8x128xf32> to vector<8x32xf32>
    %337 = vector.extract_strided_slice %332 {offsets = [0, 96], sizes = [8, 32], strides = [1, 1]} : vector<8x128xf32> to vector<8x32xf32>
    %338 = arith.mulf %335, %286 : vector<8x32xf32>
    %339 = arith.mulf %334, %336 : vector<8x32xf32>
    %340 = arith.addf %338, %339 : vector<8x32xf32>
    %341 = math.tanh %340 : vector<8x32xf32>
    %342 = arith.mulf %337, %341 : vector<8x32xf32>
    %343 = arith.negf %327 : vector<8x128xf32>
    %344 = math.exp %343 : vector<8x128xf32>
    %cst_187 = arith.constant 1.000000e+00 : f32
    %345 = vector.broadcast %cst_187 : f32 to vector<8x128xf32>
    %346 = arith.addf %345, %344 : vector<8x128xf32>
    %347 = arith.divf %345, %346 : vector<8x128xf32>
    %348 = math.tanh %327 : vector<8x128xf32>
    %349 = vector.extract_strided_slice %347 {offsets = [0, 0], sizes = [8, 32], strides = [1, 1]} : vector<8x128xf32> to vector<8x32xf32>
    %350 = vector.extract_strided_slice %347 {offsets = [0, 32], sizes = [8, 32], strides = [1, 1]} : vector<8x128xf32> to vector<8x32xf32>
    %351 = vector.extract_strided_slice %348 {offsets = [0, 64], sizes = [8, 32], strides = [1, 1]} : vector<8x128xf32> to vector<8x32xf32>
    %352 = vector.extract_strided_slice %347 {offsets = [0, 96], sizes = [8, 32], strides = [1, 1]} : vector<8x128xf32> to vector<8x32xf32>
    %353 = arith.mulf %350, %301 : vector<8x32xf32>
    %354 = arith.mulf %349, %351 : vector<8x32xf32>
    %355 = arith.addf %353, %354 : vector<8x32xf32>
    %356 = math.tanh %355 : vector<8x32xf32>
    %357 = arith.mulf %352, %356 : vector<8x32xf32>
    %358 = vector.extract_strided_slice %342 {offsets = [0, 0], sizes = [1, 32], strides = [1, 1]} : vector<8x32xf32> to vector<1x32xf32>
    %c0_188 = arith.constant 0 : index
    %c4_189 = arith.constant 4 : index
    %c0_190 = arith.constant 0 : index
    %359 = vector.load %arg6[%c0_188, %c4_189, %c0_190] : memref<2x8x64xf32, #tpu.memory_space<vmem>>, vector<1x1x32xf32>
    %360 = vector.shape_cast %359 : vector<1x1x32xf32> to vector<1x32xf32>
    %361 = vector.shape_cast %358 : vector<1x32xf32> to vector<1x1x32xf32>
    tpu.vector_store %arg6[%c0_188, %c4_189, %c0_190], %361 {strides = array<i32>} : memref<2x8x64xf32, #tpu.memory_space<vmem>>, vector<1x1x32xf32>,
    %362 = vector.extract_strided_slice %357 {offsets = [0, 0], sizes = [1, 32], strides = [1, 1]} : vector<8x32xf32> to vector<1x32xf32>
    %c0_191 = arith.constant 0 : index
    %c3_192 = arith.constant 3 : index
    %c32_193 = arith.constant 32 : index
    %363 = vector.load %arg6[%c0_191, %c3_192, %c32_193] : memref<2x8x64xf32, #tpu.memory_space<vmem>>, vector<1x1x32xf32>
    %364 = vector.shape_cast %363 : vector<1x1x32xf32> to vector<1x32xf32>
    %365 = vector.shape_cast %362 : vector<1x32xf32> to vector<1x1x32xf32>
    tpu.vector_store %arg6[%c0_191, %c3_192, %c32_193], %365 {strides = array<i32>} : memref<2x8x64xf32, #tpu.memory_space<vmem>>, vector<1x1x32xf32>,
    %366 = vector.extract_strided_slice %342 {offsets = [1, 0], sizes = [1, 32], strides = [1, 1]} : vector<8x32xf32> to vector<1x32xf32>
    %c1_194 = arith.constant 1 : index
    %c4_195 = arith.constant 4 : index
    %c0_196 = arith.constant 0 : index
    %367 = vector.load %arg6[%c1_194, %c4_195, %c0_196] : memref<2x8x64xf32, #tpu.memory_space<vmem>>, vector<1x1x32xf32>
    %368 = vector.shape_cast %367 : vector<1x1x32xf32> to vector<1x32xf32>
    %369 = vector.shape_cast %366 : vector<1x32xf32> to vector<1x1x32xf32>
    tpu.vector_store %arg6[%c1_194, %c4_195, %c0_196], %369 {strides = array<i32>} : memref<2x8x64xf32, #tpu.memory_space<vmem>>, vector<1x1x32xf32>,
    %370 = vector.extract_strided_slice %357 {offsets = [1, 0], sizes = [1, 32], strides = [1, 1]} : vector<8x32xf32> to vector<1x32xf32>
    %c1_197 = arith.constant 1 : index
    %c3_198 = arith.constant 3 : index
    %c32_199 = arith.constant 32 : index
    %371 = vector.load %arg6[%c1_197, %c3_198, %c32_199] : memref<2x8x64xf32, #tpu.memory_space<vmem>>, vector<1x1x32xf32>
    %372 = vector.shape_cast %371 : vector<1x1x32xf32> to vector<1x32xf32>
    %373 = vector.shape_cast %370 : vector<1x32xf32> to vector<1x1x32xf32>
    tpu.vector_store %arg6[%c1_197, %c3_198, %c32_199], %373 {strides = array<i32>} : memref<2x8x64xf32, #tpu.memory_space<vmem>>, vector<1x1x32xf32>,
    %374 = arith.truncf %342 : vector<8x32xf32> to vector<8x32xbf16>
    %cst_200 = arith.constant dense<0.000000e+00> : vector<8x128xf32>
    %375 = tpu.matmul %374, %91, %cst_200 {dimension_numbers = #tpu.dot_dimension_numbers<[1], [0], [0], [1], [0, 0, 1, 1], [], []>} : vector<8x32xbf16>, vector<32x128xbf16>, vector<8x128xf32> -> vector<8x128xf32>
    %376 = arith.truncf %357 : vector<8x32xf32> to vector<8x32xbf16>
    %cst_201 = arith.constant dense<0.000000e+00> : vector<8x128xf32>
    %377 = tpu.matmul %376, %93, %cst_201 {dimension_numbers = #tpu.dot_dimension_numbers<[1], [0], [0], [1], [0, 0, 1, 1], [], []>} : vector<8x32xbf16>, vector<32x128xbf16>, vector<8x128xf32> -> vector<8x128xf32>
    %c40_202 = arith.constant 40 : index
    %c0_203 = arith.constant 0 : index
    %378 = vector.load %arg9[%c40_202, %c0_203] : memref<64x256xf32, #tpu.memory_space<vmem>>, vector<8x128xf32>
    %379 = arith.addf %378, %375 : vector<8x128xf32>
    %c16_204 = arith.constant 16 : index
    %c128_205 = arith.constant 128 : index
    %380 = vector.load %arg9[%c16_204, %c128_205] : memref<64x256xf32, #tpu.memory_space<vmem>>, vector<8x128xf32>
    %381 = arith.addf %380, %377 : vector<8x128xf32>
    %382 = arith.negf %379 : vector<8x128xf32>
    %383 = math.exp %382 : vector<8x128xf32>
    %cst_206 = arith.constant 1.000000e+00 : f32
    %384 = vector.broadcast %cst_206 : f32 to vector<8x128xf32>
    %385 = arith.addf %384, %383 : vector<8x128xf32>
    %386 = arith.divf %384, %385 : vector<8x128xf32>
    %387 = math.tanh %379 : vector<8x128xf32>
    %388 = vector.extract_strided_slice %386 {offsets = [0, 0], sizes = [8, 32], strides = [1, 1]} : vector<8x128xf32> to vector<8x32xf32>
    %389 = vector.extract_strided_slice %386 {offsets = [0, 32], sizes = [8, 32], strides = [1, 1]} : vector<8x128xf32> to vector<8x32xf32>
    %390 = vector.extract_strided_slice %387 {offsets = [0, 64], sizes = [8, 32], strides = [1, 1]} : vector<8x128xf32> to vector<8x32xf32>
    %391 = vector.extract_strided_slice %386 {offsets = [0, 96], sizes = [8, 32], strides = [1, 1]} : vector<8x128xf32> to vector<8x32xf32>
    %392 = arith.mulf %389, %340 : vector<8x32xf32>
    %393 = arith.mulf %388, %390 : vector<8x32xf32>
    %394 = arith.addf %392, %393 : vector<8x32xf32>
    %395 = math.tanh %394 : vector<8x32xf32>
    %396 = arith.mulf %391, %395 : vector<8x32xf32>
    %397 = arith.negf %381 : vector<8x128xf32>
    %398 = math.exp %397 : vector<8x128xf32>
    %cst_207 = arith.constant 1.000000e+00 : f32
    %399 = vector.broadcast %cst_207 : f32 to vector<8x128xf32>
    %400 = arith.addf %399, %398 : vector<8x128xf32>
    %401 = arith.divf %399, %400 : vector<8x128xf32>
    %402 = math.tanh %381 : vector<8x128xf32>
    %403 = vector.extract_strided_slice %401 {offsets = [0, 0], sizes = [8, 32], strides = [1, 1]} : vector<8x128xf32> to vector<8x32xf32>
    %404 = vector.extract_strided_slice %401 {offsets = [0, 32], sizes = [8, 32], strides = [1, 1]} : vector<8x128xf32> to vector<8x32xf32>
    %405 = vector.extract_strided_slice %402 {offsets = [0, 64], sizes = [8, 32], strides = [1, 1]} : vector<8x128xf32> to vector<8x32xf32>
    %406 = vector.extract_strided_slice %401 {offsets = [0, 96], sizes = [8, 32], strides = [1, 1]} : vector<8x128xf32> to vector<8x32xf32>
    %407 = arith.mulf %404, %355 : vector<8x32xf32>
    %408 = arith.mulf %403, %405 : vector<8x32xf32>
    %409 = arith.addf %407, %408 : vector<8x32xf32>
    %410 = math.tanh %409 : vector<8x32xf32>
    %411 = arith.mulf %406, %410 : vector<8x32xf32>
    %412 = vector.extract_strided_slice %396 {offsets = [0, 0], sizes = [1, 32], strides = [1, 1]} : vector<8x32xf32> to vector<1x32xf32>
    %c0_208 = arith.constant 0 : index
    %c5_209 = arith.constant 5 : index
    %c0_210 = arith.constant 0 : index
    %413 = vector.load %arg6[%c0_208, %c5_209, %c0_210] : memref<2x8x64xf32, #tpu.memory_space<vmem>>, vector<1x1x32xf32>
    %414 = vector.shape_cast %413 : vector<1x1x32xf32> to vector<1x32xf32>
    %415 = vector.shape_cast %412 : vector<1x32xf32> to vector<1x1x32xf32>
    tpu.vector_store %arg6[%c0_208, %c5_209, %c0_210], %415 {strides = array<i32>} : memref<2x8x64xf32, #tpu.memory_space<vmem>>, vector<1x1x32xf32>,
    %416 = vector.extract_strided_slice %411 {offsets = [0, 0], sizes = [1, 32], strides = [1, 1]} : vector<8x32xf32> to vector<1x32xf32>
    %c0_211 = arith.constant 0 : index
    %c2_212 = arith.constant 2 : index
    %c32_213 = arith.constant 32 : index
    %417 = vector.load %arg6[%c0_211, %c2_212, %c32_213] : memref<2x8x64xf32, #tpu.memory_space<vmem>>, vector<1x1x32xf32>
    %418 = vector.shape_cast %417 : vector<1x1x32xf32> to vector<1x32xf32>
    %419 = vector.shape_cast %416 : vector<1x32xf32> to vector<1x1x32xf32>
    tpu.vector_store %arg6[%c0_211, %c2_212, %c32_213], %419 {strides = array<i32>} : memref<2x8x64xf32, #tpu.memory_space<vmem>>, vector<1x1x32xf32>,
    %420 = vector.extract_strided_slice %396 {offsets = [1, 0], sizes = [1, 32], strides = [1, 1]} : vector<8x32xf32> to vector<1x32xf32>
    %c1_214 = arith.constant 1 : index
    %c5_215 = arith.constant 5 : index
    %c0_216 = arith.constant 0 : index
    %421 = vector.load %arg6[%c1_214, %c5_215, %c0_216] : memref<2x8x64xf32, #tpu.memory_space<vmem>>, vector<1x1x32xf32>
    %422 = vector.shape_cast %421 : vector<1x1x32xf32> to vector<1x32xf32>
    %423 = vector.shape_cast %420 : vector<1x32xf32> to vector<1x1x32xf32>
    tpu.vector_store %arg6[%c1_214, %c5_215, %c0_216], %423 {strides = array<i32>} : memref<2x8x64xf32, #tpu.memory_space<vmem>>, vector<1x1x32xf32>,
    %424 = vector.extract_strided_slice %411 {offsets = [1, 0], sizes = [1, 32], strides = [1, 1]} : vector<8x32xf32> to vector<1x32xf32>
    %c1_217 = arith.constant 1 : index
    %c2_218 = arith.constant 2 : index
    %c32_219 = arith.constant 32 : index
    %425 = vector.load %arg6[%c1_217, %c2_218, %c32_219] : memref<2x8x64xf32, #tpu.memory_space<vmem>>, vector<1x1x32xf32>
    %426 = vector.shape_cast %425 : vector<1x1x32xf32> to vector<1x32xf32>
    %427 = vector.shape_cast %424 : vector<1x32xf32> to vector<1x1x32xf32>
    tpu.vector_store %arg6[%c1_217, %c2_218, %c32_219], %427 {strides = array<i32>} : memref<2x8x64xf32, #tpu.memory_space<vmem>>, vector<1x1x32xf32>,
    %428 = arith.truncf %396 : vector<8x32xf32> to vector<8x32xbf16>
    %cst_220 = arith.constant dense<0.000000e+00> : vector<8x128xf32>
    %429 = tpu.matmul %428, %91, %cst_220 {dimension_numbers = #tpu.dot_dimension_numbers<[1], [0], [0], [1], [0, 0, 1, 1], [], []>} : vector<8x32xbf16>, vector<32x128xbf16>, vector<8x128xf32> -> vector<8x128xf32>
    %430 = arith.truncf %411 : vector<8x32xf32> to vector<8x32xbf16>
    %cst_221 = arith.constant dense<0.000000e+00> : vector<8x128xf32>
    %431 = tpu.matmul %430, %93, %cst_221 {dimension_numbers = #tpu.dot_dimension_numbers<[1], [0], [0], [1], [0, 0, 1, 1], [], []>} : vector<8x32xbf16>, vector<32x128xbf16>, vector<8x128xf32> -> vector<8x128xf32>
    %c48_222 = arith.constant 48 : index
    %c0_223 = arith.constant 0 : index
    %432 = vector.load %arg9[%c48_222, %c0_223] : memref<64x256xf32, #tpu.memory_space<vmem>>, vector<8x128xf32>
    %433 = arith.addf %432, %429 : vector<8x128xf32>
    %c8_224 = arith.constant 8 : index
    %c128_225 = arith.constant 128 : index
    %434 = vector.load %arg9[%c8_224, %c128_225] : memref<64x256xf32, #tpu.memory_space<vmem>>, vector<8x128xf32>
    %435 = arith.addf %434, %431 : vector<8x128xf32>
    %436 = arith.negf %433 : vector<8x128xf32>
    %437 = math.exp %436 : vector<8x128xf32>
    %cst_226 = arith.constant 1.000000e+00 : f32
    %438 = vector.broadcast %cst_226 : f32 to vector<8x128xf32>
    %439 = arith.addf %438, %437 : vector<8x128xf32>
    %440 = arith.divf %438, %439 : vector<8x128xf32>
    %441 = math.tanh %433 : vector<8x128xf32>
    %442 = vector.extract_strided_slice %440 {offsets = [0, 0], sizes = [8, 32], strides = [1, 1]} : vector<8x128xf32> to vector<8x32xf32>
    %443 = vector.extract_strided_slice %440 {offsets = [0, 32], sizes = [8, 32], strides = [1, 1]} : vector<8x128xf32> to vector<8x32xf32>
    %444 = vector.extract_strided_slice %441 {offsets = [0, 64], sizes = [8, 32], strides = [1, 1]} : vector<8x128xf32> to vector<8x32xf32>
    %445 = vector.extract_strided_slice %440 {offsets = [0, 96], sizes = [8, 32], strides = [1, 1]} : vector<8x128xf32> to vector<8x32xf32>
    %446 = arith.mulf %443, %394 : vector<8x32xf32>
    %447 = arith.mulf %442, %444 : vector<8x32xf32>
    %448 = arith.addf %446, %447 : vector<8x32xf32>
    %449 = math.tanh %448 : vector<8x32xf32>
    %450 = arith.mulf %445, %449 : vector<8x32xf32>
    %451 = arith.negf %435 : vector<8x128xf32>
    %452 = math.exp %451 : vector<8x128xf32>
    %cst_227 = arith.constant 1.000000e+00 : f32
    %453 = vector.broadcast %cst_227 : f32 to vector<8x128xf32>
    %454 = arith.addf %453, %452 : vector<8x128xf32>
    %455 = arith.divf %453, %454 : vector<8x128xf32>
    %456 = math.tanh %435 : vector<8x128xf32>
    %457 = vector.extract_strided_slice %455 {offsets = [0, 0], sizes = [8, 32], strides = [1, 1]} : vector<8x128xf32> to vector<8x32xf32>
    %458 = vector.extract_strided_slice %455 {offsets = [0, 32], sizes = [8, 32], strides = [1, 1]} : vector<8x128xf32> to vector<8x32xf32>
    %459 = vector.extract_strided_slice %456 {offsets = [0, 64], sizes = [8, 32], strides = [1, 1]} : vector<8x128xf32> to vector<8x32xf32>
    %460 = vector.extract_strided_slice %455 {offsets = [0, 96], sizes = [8, 32], strides = [1, 1]} : vector<8x128xf32> to vector<8x32xf32>
    %461 = arith.mulf %458, %409 : vector<8x32xf32>
    %462 = arith.mulf %457, %459 : vector<8x32xf32>
    %463 = arith.addf %461, %462 : vector<8x32xf32>
    %464 = math.tanh %463 : vector<8x32xf32>
    %465 = arith.mulf %460, %464 : vector<8x32xf32>
    %466 = vector.extract_strided_slice %450 {offsets = [0, 0], sizes = [1, 32], strides = [1, 1]} : vector<8x32xf32> to vector<1x32xf32>
    %c0_228 = arith.constant 0 : index
    %c6_229 = arith.constant 6 : index
    %c0_230 = arith.constant 0 : index
    %467 = vector.load %arg6[%c0_228, %c6_229, %c0_230] : memref<2x8x64xf32, #tpu.memory_space<vmem>>, vector<1x1x32xf32>
    %468 = vector.shape_cast %467 : vector<1x1x32xf32> to vector<1x32xf32>
    %469 = vector.shape_cast %466 : vector<1x32xf32> to vector<1x1x32xf32>
    tpu.vector_store %arg6[%c0_228, %c6_229, %c0_230], %469 {strides = array<i32>} : memref<2x8x64xf32, #tpu.memory_space<vmem>>, vector<1x1x32xf32>,
    %470 = vector.extract_strided_slice %465 {offsets = [0, 0], sizes = [1, 32], strides = [1, 1]} : vector<8x32xf32> to vector<1x32xf32>
    %c0_231 = arith.constant 0 : index
    %c1_232 = arith.constant 1 : index
    %c32_233 = arith.constant 32 : index
    %471 = vector.load %arg6[%c0_231, %c1_232, %c32_233] : memref<2x8x64xf32, #tpu.memory_space<vmem>>, vector<1x1x32xf32>
    %472 = vector.shape_cast %471 : vector<1x1x32xf32> to vector<1x32xf32>
    %473 = vector.shape_cast %470 : vector<1x32xf32> to vector<1x1x32xf32>
    tpu.vector_store %arg6[%c0_231, %c1_232, %c32_233], %473 {strides = array<i32>} : memref<2x8x64xf32, #tpu.memory_space<vmem>>, vector<1x1x32xf32>,
    %474 = vector.extract_strided_slice %450 {offsets = [1, 0], sizes = [1, 32], strides = [1, 1]} : vector<8x32xf32> to vector<1x32xf32>
    %c1_234 = arith.constant 1 : index
    %c6_235 = arith.constant 6 : index
    %c0_236 = arith.constant 0 : index
    %475 = vector.load %arg6[%c1_234, %c6_235, %c0_236] : memref<2x8x64xf32, #tpu.memory_space<vmem>>, vector<1x1x32xf32>
    %476 = vector.shape_cast %475 : vector<1x1x32xf32> to vector<1x32xf32>
    %477 = vector.shape_cast %474 : vector<1x32xf32> to vector<1x1x32xf32>
    tpu.vector_store %arg6[%c1_234, %c6_235, %c0_236], %477 {strides = array<i32>} : memref<2x8x64xf32, #tpu.memory_space<vmem>>, vector<1x1x32xf32>,
    %478 = vector.extract_strided_slice %465 {offsets = [1, 0], sizes = [1, 32], strides = [1, 1]} : vector<8x32xf32> to vector<1x32xf32>
    %c1_237 = arith.constant 1 : index
    %c1_238 = arith.constant 1 : index
    %c32_239 = arith.constant 32 : index
    %479 = vector.load %arg6[%c1_237, %c1_238, %c32_239] : memref<2x8x64xf32, #tpu.memory_space<vmem>>, vector<1x1x32xf32>
    %480 = vector.shape_cast %479 : vector<1x1x32xf32> to vector<1x32xf32>
    %481 = vector.shape_cast %478 : vector<1x32xf32> to vector<1x1x32xf32>
    tpu.vector_store %arg6[%c1_237, %c1_238, %c32_239], %481 {strides = array<i32>} : memref<2x8x64xf32, #tpu.memory_space<vmem>>, vector<1x1x32xf32>,
    %482 = arith.truncf %450 : vector<8x32xf32> to vector<8x32xbf16>
    %cst_240 = arith.constant dense<0.000000e+00> : vector<8x128xf32>
    %483 = tpu.matmul %482, %91, %cst_240 {dimension_numbers = #tpu.dot_dimension_numbers<[1], [0], [0], [1], [0, 0, 1, 1], [], []>} : vector<8x32xbf16>, vector<32x128xbf16>, vector<8x128xf32> -> vector<8x128xf32>
    %484 = arith.truncf %465 : vector<8x32xf32> to vector<8x32xbf16>
    %cst_241 = arith.constant dense<0.000000e+00> : vector<8x128xf32>
    %485 = tpu.matmul %484, %93, %cst_241 {dimension_numbers = #tpu.dot_dimension_numbers<[1], [0], [0], [1], [0, 0, 1, 1], [], []>} : vector<8x32xbf16>, vector<32x128xbf16>, vector<8x128xf32> -> vector<8x128xf32>
    %c56_242 = arith.constant 56 : index
    %c0_243 = arith.constant 0 : index
    %486 = vector.load %arg9[%c56_242, %c0_243] : memref<64x256xf32, #tpu.memory_space<vmem>>, vector<8x128xf32>
    %487 = arith.addf %486, %483 : vector<8x128xf32>
    %c0_244 = arith.constant 0 : index
    %c128_245 = arith.constant 128 : index
    %488 = vector.load %arg9[%c0_244, %c128_245] : memref<64x256xf32, #tpu.memory_space<vmem>>, vector<8x128xf32>
    %489 = arith.addf %488, %485 : vector<8x128xf32>
    %490 = arith.negf %487 : vector<8x128xf32>
    %491 = math.exp %490 : vector<8x128xf32>
    %cst_246 = arith.constant 1.000000e+00 : f32
    %492 = vector.broadcast %cst_246 : f32 to vector<8x128xf32>
    %493 = arith.addf %492, %491 : vector<8x128xf32>
    %494 = arith.divf %492, %493 : vector<8x128xf32>
    %495 = math.tanh %487 : vector<8x128xf32>
    %496 = vector.extract_strided_slice %494 {offsets = [0, 0], sizes = [8, 32], strides = [1, 1]} : vector<8x128xf32> to vector<8x32xf32>
    %497 = vector.extract_strided_slice %494 {offsets = [0, 32], sizes = [8, 32], strides = [1, 1]} : vector<8x128xf32> to vector<8x32xf32>
    %498 = vector.extract_strided_slice %495 {offsets = [0, 64], sizes = [8, 32], strides = [1, 1]} : vector<8x128xf32> to vector<8x32xf32>
    %499 = vector.extract_strided_slice %494 {offsets = [0, 96], sizes = [8, 32], strides = [1, 1]} : vector<8x128xf32> to vector<8x32xf32>
    %500 = arith.mulf %497, %448 : vector<8x32xf32>
    %501 = arith.mulf %496, %498 : vector<8x32xf32>
    %502 = arith.addf %500, %501 : vector<8x32xf32>
    %503 = math.tanh %502 : vector<8x32xf32>
    %504 = arith.mulf %499, %503 : vector<8x32xf32>
    %505 = arith.negf %489 : vector<8x128xf32>
    %506 = math.exp %505 : vector<8x128xf32>
    %cst_247 = arith.constant 1.000000e+00 : f32
    %507 = vector.broadcast %cst_247 : f32 to vector<8x128xf32>
    %508 = arith.addf %507, %506 : vector<8x128xf32>
    %509 = arith.divf %507, %508 : vector<8x128xf32>
    %510 = math.tanh %489 : vector<8x128xf32>
    %511 = vector.extract_strided_slice %509 {offsets = [0, 0], sizes = [8, 32], strides = [1, 1]} : vector<8x128xf32> to vector<8x32xf32>
    %512 = vector.extract_strided_slice %509 {offsets = [0, 32], sizes = [8, 32], strides = [1, 1]} : vector<8x128xf32> to vector<8x32xf32>
    %513 = vector.extract_strided_slice %510 {offsets = [0, 64], sizes = [8, 32], strides = [1, 1]} : vector<8x128xf32> to vector<8x32xf32>
    %514 = vector.extract_strided_slice %509 {offsets = [0, 96], sizes = [8, 32], strides = [1, 1]} : vector<8x128xf32> to vector<8x32xf32>
    %515 = arith.mulf %512, %463 : vector<8x32xf32>
    %516 = arith.mulf %511, %513 : vector<8x32xf32>
    %517 = arith.addf %515, %516 : vector<8x32xf32>
    %518 = math.tanh %517 : vector<8x32xf32>
    %519 = arith.mulf %514, %518 : vector<8x32xf32>
    %520 = vector.extract_strided_slice %504 {offsets = [0, 0], sizes = [1, 32], strides = [1, 1]} : vector<8x32xf32> to vector<1x32xf32>
    %c0_248 = arith.constant 0 : index
    %c7_249 = arith.constant 7 : index
    %c0_250 = arith.constant 0 : index
    %521 = vector.load %arg6[%c0_248, %c7_249, %c0_250] : memref<2x8x64xf32, #tpu.memory_space<vmem>>, vector<1x1x32xf32>
    %522 = vector.shape_cast %521 : vector<1x1x32xf32> to vector<1x32xf32>
    %523 = vector.shape_cast %520 : vector<1x32xf32> to vector<1x1x32xf32>
    tpu.vector_store %arg6[%c0_248, %c7_249, %c0_250], %523 {strides = array<i32>} : memref<2x8x64xf32, #tpu.memory_space<vmem>>, vector<1x1x32xf32>,
    %524 = vector.extract_strided_slice %519 {offsets = [0, 0], sizes = [1, 32], strides = [1, 1]} : vector<8x32xf32> to vector<1x32xf32>
    %c0_251 = arith.constant 0 : index
    %c0_252 = arith.constant 0 : index
    %c32_253 = arith.constant 32 : index
    %525 = vector.load %arg6[%c0_251, %c0_252, %c32_253] : memref<2x8x64xf32, #tpu.memory_space<vmem>>, vector<1x1x32xf32>
    %526 = vector.shape_cast %525 : vector<1x1x32xf32> to vector<1x32xf32>
    %527 = vector.shape_cast %524 : vector<1x32xf32> to vector<1x1x32xf32>
    tpu.vector_store %arg6[%c0_251, %c0_252, %c32_253], %527 {strides = array<i32>} : memref<2x8x64xf32, #tpu.memory_space<vmem>>, vector<1x1x32xf32>,
    %528 = vector.extract_strided_slice %504 {offsets = [1, 0], sizes = [1, 32], strides = [1, 1]} : vector<8x32xf32> to vector<1x32xf32>
    %c1_254 = arith.constant 1 : index
    %c7_255 = arith.constant 7 : index
    %c0_256 = arith.constant 0 : index
    %529 = vector.load %arg6[%c1_254, %c7_255, %c0_256] : memref<2x8x64xf32, #tpu.memory_space<vmem>>, vector<1x1x32xf32>
    %530 = vector.shape_cast %529 : vector<1x1x32xf32> to vector<1x32xf32>
    %531 = vector.shape_cast %528 : vector<1x32xf32> to vector<1x1x32xf32>
    tpu.vector_store %arg6[%c1_254, %c7_255, %c0_256], %531 {strides = array<i32>} : memref<2x8x64xf32, #tpu.memory_space<vmem>>, vector<1x1x32xf32>,
    %532 = vector.extract_strided_slice %519 {offsets = [1, 0], sizes = [1, 32], strides = [1, 1]} : vector<8x32xf32> to vector<1x32xf32>
    %c1_257 = arith.constant 1 : index
    %c0_258 = arith.constant 0 : index
    %c32_259 = arith.constant 32 : index
    %533 = vector.load %arg6[%c1_257, %c0_258, %c32_259] : memref<2x8x64xf32, #tpu.memory_space<vmem>>, vector<1x1x32xf32>
    %534 = vector.shape_cast %533 : vector<1x1x32xf32> to vector<1x32xf32>
    %535 = vector.shape_cast %532 : vector<1x32xf32> to vector<1x1x32xf32>
    tpu.vector_store %arg6[%c1_257, %c0_258, %c32_259], %535 {strides = array<i32>} : memref<2x8x64xf32, #tpu.memory_space<vmem>>, vector<1x1x32xf32>,
    %536 = vector.extract_strided_slice %504 {offsets = [0, 0], sizes = [2, 32], strides = [1, 1]} : vector<8x32xf32> to vector<2x32xf32>
    %c0_260 = arith.constant 0 : index
    %c0_261 = arith.constant 0 : index
    %c0_262 = arith.constant 0 : index
    %537 = vector.load %arg7[%c0_260, %c0_261, %c0_262] : memref<2x2x32xf32, #tpu.memory_space<vmem>>, vector<1x2x32xf32>
    %538 = vector.shape_cast %537 : vector<1x2x32xf32> to vector<2x32xf32>
    %539 = vector.shape_cast %536 : vector<2x32xf32> to vector<1x2x32xf32>
    tpu.vector_store %arg7[%c0_260, %c0_261, %c0_262], %539 {strides = array<i32>} : memref<2x2x32xf32, #tpu.memory_space<vmem>>, vector<1x2x32xf32>,
    %540 = vector.extract_strided_slice %519 {offsets = [0, 0], sizes = [2, 32], strides = [1, 1]} : vector<8x32xf32> to vector<2x32xf32>
    %c1_263 = arith.constant 1 : index
    %c0_264 = arith.constant 0 : index
    %c0_265 = arith.constant 0 : index
    %541 = vector.load %arg7[%c1_263, %c0_264, %c0_265] : memref<2x2x32xf32, #tpu.memory_space<vmem>>, vector<1x2x32xf32>
    %542 = vector.shape_cast %541 : vector<1x2x32xf32> to vector<2x32xf32>
    %543 = vector.shape_cast %540 : vector<2x32xf32> to vector<1x2x32xf32>
    tpu.vector_store %arg7[%c1_263, %c0_264, %c0_265], %543 {strides = array<i32>} : memref<2x2x32xf32, #tpu.memory_space<vmem>>, vector<1x2x32xf32>,
    return
  }
}

</mosaic_0001>

<llo_original>
// kernel: tpu_custom_call.1
$region0: #{tpu_custom_call.1}
  #allocation0 [shape = 'u32[]', space=smem, size = 0x4, offset = 0x4, fixed_abs, tag = 'smem constant byte address 0x4 - core index']
  #allocation1 [shape = 'u32[72,128]{1,0:T(1,128)}', space=vmem, size = 0x9000, scoped, tag = 'internal scratch']
  #allocation2 [shape = 'f32[64,16]{1,0:T(8,128)}', space=vmem, size = 0x8000, scoped, tag = 'scratch operand']
  #allocation3 [shape = 'f32[64,256]{1,0:T(8,128)}', space=vmem, size = 0x10000, scoped, tag = 'scratch operand']
  %s0 = inlined_call_operand.vmem [shape: s32[2,8], index: 0, kind: input, shape index: {}]
  %s1 = inlined_call_operand.vmem [shape: f32[2,2,32], index: 1, kind: input, shape index: {}]
  %s2 = inlined_call_operand.vmem [shape: f32[100,1,16], index: 2, kind: input, shape index: {}]
  %s3 = inlined_call_operand.vmem [shape: bf16[16,256], index: 3, kind: input, shape index: {}]
  %s4 = inlined_call_operand.vmem [shape: bf16[2,32,128], index: 4, kind: input, shape index: {}]
  %s5 = inlined_call_operand.vmem [shape: f32[1,256], index: 5, kind: input, shape index: {}]
  %s6 = inlined_call_operand.hbm [shape: f32[2,8,64], index: 6, kind: output, shape index: {0}]
  %s7 = inlined_call_operand.hbm [shape: f32[2,2,32], index: 7, kind: output, shape index: {1}]
  %8 = xla_tuple %s6, %s7
  %s9 = sld [smem:[#allocation0]]
  $region46: #{tpu_custom_call.1} parent=0
    _
  %s11 = ssub.s32 1, %s9
  %s12 = scalar_select 0, %s11, %s9
  $region1: #{tpu_custom_call.1} parent=0
    #allocation4 [shape = 'u8[1024]{0}', space=smem, size = 0x400, scoped, tag = 'input window, operand 0, single buffered']
    #allocation5 [shape = 's32[1]{0}', space=sflag, size = 0x4, scoped, tag = 'scoped memory for tpu_custom_call.1']
    #allocation6 [shape = 's32[1]{0}', space=sflag, size = 0x4, scoped, tag = 'scoped memory for tpu_custom_call.1']
    #allocation7 [shape = 'u8[8192]{0}', space=vmem, size = 0x2000, scoped, tag = 'output window, operand 0, single buffered']
    #allocation8 [shape = 'u8[2048]{0}', space=vmem, size = 0x800, scoped, tag = 'output window, operand 1, single buffered']
    #allocation9 [shape = 's32[1]{0}', space=sflag, size = 0x4, scoped, tag = 'scoped memory for tpu_custom_call.1']
    %13 = vsyncpa [#allocation6], 0
    %14 = vsyncpa [#allocation5], 0
    %15 = vsyncpa [#allocation9], 0
    // Predicated region
    $region2: #{tpu_custom_call.1} parent=1 // pred_check
      _
    $region3: #{tpu_custom_call.1} parent=1 // pred_check_branch
      %17 = sbr.rel (0) target = $region5
    $region4: #{tpu_custom_call.1} parent=1 // pred_region
      %19 = vsyncadd [#allocation6], 0
      %s21 = sshll.u32 %s0, 4
      %s22 = int_to_ptr.vmem [resolvable:$true] %s21
      %24 = dma.vmem_to_smem %s22, 32, [#allocation4], [#allocation6]
    $region5: #{tpu_custom_call.1} parent=1 // pred_fallthru
      _
    // Predicated region
    $region6: #{tpu_custom_call.1} parent=1 // pred_check
      _
    $region7: #{tpu_custom_call.1} parent=1 // pred_check_branch
      %26 = sbr.rel (0) target = $region9
    $region8: #{tpu_custom_call.1} parent=1 // pred_region
      _
    $region9: #{tpu_custom_call.1} parent=1 // pred_fallthru
      _
    // Predicated region
    $region10: #{tpu_custom_call.1} parent=1 // pred_check
      _
    $region11: #{tpu_custom_call.1} parent=1 // pred_check_branch
      %28 = sbr.rel (0) target = $region13
    $region12: #{tpu_custom_call.1} parent=1 // pred_region
      _
    $region13: #{tpu_custom_call.1} parent=1 // pred_fallthru
      _
    // Predicated region
    $region14: #{tpu_custom_call.1} parent=1 // pred_check
      _
    $region15: #{tpu_custom_call.1} parent=1 // pred_check_branch
      %30 = sbr.rel (0) target = $region17
    $region16: #{tpu_custom_call.1} parent=1 // pred_region
      _
    $region17: #{tpu_custom_call.1} parent=1 // pred_fallthru
      _
    // Predicated region
    $region18: #{tpu_custom_call.1} parent=1 // pred_check
      _
    $region19: #{tpu_custom_call.1} parent=1 // pred_check_branch
      %32 = sbr.rel (0) target = $region21
    $region20: #{tpu_custom_call.1} parent=1 // pred_region
      _
    $region21: #{tpu_custom_call.1} parent=1 // pred_fallthru
      _
    // Predicated region
    $region22: #{tpu_custom_call.1} parent=1 // pred_check
      _
    $region23: #{tpu_custom_call.1} parent=1 // pred_check_branch
      %34 = sbr.rel (0) target = $region25
    $region24: #{tpu_custom_call.1} parent=1 // pred_region
      _
    $region25: #{tpu_custom_call.1} parent=1 // pred_fallthru
      _
    // Predicated region
    $region26: #{tpu_custom_call.1} parent=1 // pred_check
      _
    $region27: #{tpu_custom_call.1} parent=1 // pred_check_branch
      %36 = sbr.rel (0) target = $region29
    $region28: #{tpu_custom_call.1} parent=1 // pred_region
      %38 = dma.done [#allocation6], 32
    $region29: #{tpu_custom_call.1} parent=1 // pred_fallthru
      _
    %39 = sfence
    %vm41 = vcmask 130048
    %42 = vst.msk [vmem:[#allocation2] sm:$0xff] %vm41, 0.0
    %43 = vst.msk [vmem:[#allocation2 + $0x8] sm:$0xff] %vm41, 0.0
    %44 = vst.msk [vmem:[#allocation2 + $0x10] sm:$0xff] %vm41, 0.0
    %45 = vst.msk [vmem:[#allocation2 + $0x18] sm:$0xff] %vm41, 0.0
    %46 = vst.msk [vmem:[#allocation2 + $0x20] sm:$0xff] %vm41, 0.0
    %47 = vst.msk [vmem:[#allocation2 + $0x28] sm:$0xff] %vm41, 0.0
    %48 = vst.msk [vmem:[#allocation2 + $0x30] sm:$0xff] %vm41, 0.0
    %49 = vst.msk [vmem:[#allocation2 + $0x38] sm:$0xff] %vm41, 0.0
    %s50 = sld [smem:[#allocation4]]
    %s51 = scalar_lea.vmem %s2, %s50
    %v52 = vld [vmem:[%s51] sm:$0x1]
    %vm53 = vcmask 122880
    %54 = vst.msk [vmem:[#allocation2] sm:$0x1] %vm53, %v52
    %s55 = sld [smem:[#allocation4 + $0x80]]
    %s56 = scalar_lea.vmem %s2, %s55
    %v57 = vld [vmem:[%s56] sm:$0x1]
    %58 = vst.msk [vmem:[#allocation2 + $0x1] sm:$0x1] %vm53, %v57
    %s59 = sld [smem:[#allocation4 + $0x1]]
    %s60 = scalar_lea.vmem %s2, %s59
    %v61 = vld [vmem:[%s60] sm:$0x1]
    %62 = vst.msk [vmem:[#allocation2 + $0x8] sm:$0x1] %vm53, %v61
    %s63 = sld [smem:[#allocation4 + $0x81]]
    %s64 = scalar_lea.vmem %s2, %s63
    %v65 = vld [vmem:[%s64] sm:$0x1]
    %66 = vst.msk [vmem:[#allocation2 + $0x9] sm:$0x1] %vm53, %v65
    %s67 = sld [smem:[#allocation4 + $0x2]]
    %s68 = scalar_lea.vmem %s2, %s67
    %v69 = vld [vmem:[%s68] sm:$0x1]
    %70 = vst.msk [vmem:[#allocation2 + $0x10] sm:$0x1] %vm53, %v69
    %s71 = sld [smem:[#allocation4 + $0x82]]
    %s72 = scalar_lea.vmem %s2, %s71
    %v73 = vld [vmem:[%s72] sm:$0x1]
    %74 = vst.msk [vmem:[#allocation2 + $0x11] sm:$0x1] %vm53, %v73
    %s75 = sld [smem:[#allocation4 + $0x3]]
    %s76 = scalar_lea.vmem %s2, %s75
    %v77 = vld [vmem:[%s76] sm:$0x1]
    %78 = vst.msk [vmem:[#allocation2 + $0x18] sm:$0x1] %vm53, %v77
    %s79 = sld [smem:[#allocation4 + $0x83]]
    %s80 = scalar_lea.vmem %s2, %s79
    %v81 = vld [vmem:[%s80] sm:$0x1]
    %82 = vst.msk [vmem:[#allocation2 + $0x19] sm:$0x1] %vm53, %v81
    %s83 = sld [smem:[#allocation4 + $0x4]]
    %s84 = scalar_lea.vmem %s2, %s83
    %v85 = vld [vmem:[%s84] sm:$0x1]
    %86 = vst.msk [vmem:[#allocation2 + $0x20] sm:$0x1] %vm53, %v85
    %s87 = sld [smem:[#allocation4 + $0x84]]
    %s88 = scalar_lea.vmem %s2, %s87
    %v89 = vld [vmem:[%s88] sm:$0x1]
    %90 = vst.msk [vmem:[#allocation2 + $0x21] sm:$0x1] %vm53, %v89
    %s91 = sld [smem:[#allocation4 + $0x5]]
    %s92 = scalar_lea.vmem %s2, %s91
    %v93 = vld [vmem:[%s92] sm:$0x1]
    %94 = vst.msk [vmem:[#allocation2 + $0x28] sm:$0x1] %vm53, %v93
    %s95 = sld [smem:[#allocation4 + $0x85]]
    %s96 = scalar_lea.vmem %s2, %s95
    %v97 = vld [vmem:[%s96] sm:$0x1]
    %98 = vst.msk [vmem:[#allocation2 + $0x29] sm:$0x1] %vm53, %v97
    %s99 = sld [smem:[#allocation4 + $0x6]]
    %s100 = scalar_lea.vmem %s2, %s99
    %v101 = vld [vmem:[%s100] sm:$0x1]
    %102 = vst.msk [vmem:[#allocation2 + $0x30] sm:$0x1] %vm53, %v101
    %s103 = sld [smem:[#allocation4 + $0x86]]
    %s104 = scalar_lea.vmem %s2, %s103
    %v105 = vld [vmem:[%s104] sm:$0x1]
    %106 = vst.msk [vmem:[#allocation2 + $0x31] sm:$0x1] %vm53, %v105
    %s107 = sld [smem:[#allocation4 + $0x7]]
    %s108 = scalar_lea.vmem %s2, %s107
    %v109 = vld [vmem:[%s108] sm:$0x1]
    %110 = vst.msk [vmem:[#allocation2 + $0x38] sm:$0x1] %vm53, %v109
    %s111 = sld [smem:[#allocation4 + $0x87]]
    %s112 = scalar_lea.vmem %s2, %s111
    %v113 = vld [vmem:[%s112] sm:$0x1]
    %114 = vst.msk [vmem:[#allocation2 + $0x39] sm:$0x1] %vm53, %v113
    %v115 = vld [vmem:[#allocation2] sm:$0xff]
    %v116 = vld [vmem:[#allocation2 + $0x8] sm:$0xff]
    %v117 = vld [vmem:[#allocation2 + $0x10] sm:$0xff]
    %v118 = vld [vmem:[#allocation2 + $0x18] sm:$0xff]
    %v119 = vld [vmem:[#allocation2 + $0x20] sm:$0xff]
    %v120 = vld [vmem:[#allocation2 + $0x28] sm:$0xff]
    %v121 = vld [vmem:[#allocation2 + $0x30] sm:$0xff]
    %v122 = vld [vmem:[#allocation2 + $0x38] sm:$0xff]
    %v123 = vpack.c.bf16 %v116, %v115
    %v124 = vpack.c.bf16 %v118, %v117
    %v125 = vpack.c.bf16 %v120, %v119
    %v126 = vpack.c.bf16 %v122, %v121
    %v127 = vld [vmem:[%s3] sm:$0xff]
    %v128 = vld [vmem:[%s3 + $0x8] sm:$0xff]
    %v129 = vld [vmem:[%s5] sm:$0x3]
    %v131 = vperm.slane %v129, 0
    %v132 = vperm.slane %v129, 1
    %v137 = vunpack.c.l.b16 %v127
    %v138 = vunpack.c.h.b16 %v127
    %v139 = vunpack.c.l.b16 %v128
    %v140 = vunpack.c.h.b16 %v128
    %v141 = vpack.c.b16 %v139, %v137
    %v142 = vpack.c.b16 %v140, %v138
    %v146 = vsel %vm41, %v123, 0
    %v149 = vsel %vm41, %v124, 0
    %v152 = vsel %vm41, %v125, 0
    %v155 = vsel %vm41, %v126, 0
    %157 = vmatpush.bf16.msra.mxu0 0
    %158 = vmatpush.bf16.msra.mxu0 0
    %159 = vmatpush.bf16.msra.mxu0 0
    %160 = vmatpush.bf16.msra.mxu0 0
    %161 = vmatpush.bf16.msra.mxu0 0
    %162 = vmatpush.bf16.msra.mxu0 0
    %163 = vmatpush.bf16.msra.mxu0 0
    %164 = vmatpush.bf16.msra.mxu0 %v141
    %165 = vmatmul.bf16.gmra.mxu0 %v146
    %v166 = vpop.f32.mrf.mxu0
    %v167 = vadd.f32 %v131, %v166
    %v168 = vpop.f32.mrf.mxu0
    %v169 = vadd.f32 %v131, %v168
    %170 = vmatmul.bf16.gmra.mxu0 %v149
    %v171 = vpop.f32.mrf.mxu0
    %v172 = vadd.f32 %v131, %v171
    %v173 = vpop.f32.mrf.mxu0
    %v174 = vadd.f32 %v131, %v173
    %175 = vmatmul.bf16.gmra.mxu0 %v152
    %v176 = vpop.f32.mrf.mxu0
    %v177 = vadd.f32 %v131, %v176
    %v178 = vpop.f32.mrf.mxu0
    %v179 = vadd.f32 %v131, %v178
    %180 = vmatmul.bf16.gmra.mxu0 %v155
    %v181 = vpop.f32.mrf.mxu0
    %v182 = vadd.f32 %v131, %v181
    %v183 = vpop.f32.mrf.mxu0
    %v184 = vadd.f32 %v131, %v183
    %185 = vdwg.mxu0
    %186 = vmatpush.bf16.msra.mxu0 0
    %187 = vmatpush.bf16.msra.mxu0 0
    %188 = vmatpush.bf16.msra.mxu0 0
    %189 = vmatpush.bf16.msra.mxu0 0
    %190 = vmatpush.bf16.msra.mxu0 0
    %191 = vmatpush.bf16.msra.mxu0 0
    %192 = vmatpush.bf16.msra.mxu0 0
    %193 = vmatpush.bf16.msra.mxu0 %v142
    %194 = vmatmul.bf16.gmra.mxu0 %v146
    %v195 = vpop.f32.mrf.mxu0
    %v196 = vadd.f32 %v132, %v195
    %v197 = vpop.f32.mrf.mxu0
    %v198 = vadd.f32 %v132, %v197
    %199 = vmatmul.bf16.gmra.mxu0 %v149
    %v200 = vpop.f32.mrf.mxu0
    %v201 = vadd.f32 %v132, %v200
    %v202 = vpop.f32.mrf.mxu0
    %v203 = vadd.f32 %v132, %v202
    %204 = vmatmul.bf16.gmra.mxu0 %v152
    %v205 = vpop.f32.mrf.mxu0
    %v206 = vadd.f32 %v132, %v205
    %v207 = vpop.f32.mrf.mxu0
    %v208 = vadd.f32 %v132, %v207
    %209 = vmatmul.bf16.gmra.mxu0 %v155
    %v210 = vpop.f32.mrf.mxu0
    %v211 = vadd.f32 %v132, %v210
    %v212 = vpop.f32.mrf.mxu0
    %v213 = vadd.f32 %v132, %v212
    %214 = vdwg.mxu0
    %215 = vst [vmem:[#allocation3] sm:$0xff] %v167
    %216 = vst [vmem:[#allocation3 + $0x8] sm:$0xff] %v196
    %217 = vst [vmem:[#allocation3 + $0x10] sm:$0xff] %v169
    %218 = vst [vmem:[#allocation3 + $0x18] sm:$0xff] %v198
    %219 = vst [vmem:[#allocation3 + $0x20] sm:$0xff] %v172
    %220 = vst [vmem:[#allocation3 + $0x28] sm:$0xff] %v201
    %221 = vst [vmem:[#allocation3 + $0x30] sm:$0xff] %v174
    %222 = vst [vmem:[#allocation3 + $0x38] sm:$0xff] %v203
    %223 = vst [vmem:[#allocation3 + $0x40] sm:$0xff] %v177
    %224 = vst [vmem:[#allocation3 + $0x48] sm:$0xff] %v206
    %225 = vst [vmem:[#allocation3 + $0x50] sm:$0xff] %v179
    %226 = vst [vmem:[#allocation3 + $0x58] sm:$0xff] %v208
    %227 = vst [vmem:[#allocation3 + $0x60] sm:$0xff] %v182
    %228 = vst [vmem:[#allocation3 + $0x68] sm:$0xff] %v211
    %229 = vst [vmem:[#allocation3 + $0x70] sm:$0xff] %v184
    %230 = vst [vmem:[#allocation3 + $0x78] sm:$0xff] %v213
    %v231 = vld [vmem:[%s4] sm:$0xf]
    %v232 = vld [vmem:[%s4 + $0x4] sm:$0xf]
    %v233 = vld [vmem:[%s4 + $0x8] sm:$0xf]
    %v234 = vld [vmem:[%s4 + $0xc] sm:$0xf]
    %s235 = scalar_lea.vmem %s4, 16
    %v236 = vld [vmem:[%s235] sm:$0xf]
    %v237 = vld [vmem:[%s235 + $0x4] sm:$0xf]
    %v238 = vld [vmem:[%s235 + $0x8] sm:$0xf]
    %v239 = vld [vmem:[%s235 + $0xc] sm:$0xf]
    %v240 = vld [vmem:[%s1] sm:$0x3]
    %vm241 = vcmask 1041408
    %v242 = vsel %vm241, %v240, 0.0
    %s243 = scalar_lea.vmem %s1, 2
    %v244 = vld [vmem:[%s243] sm:$0x3]
    %v245 = vsel %vm241, %v244, 0.0
    %v246 = vpack.c.bf16 %v242, %v242
    %v251 = vunpack.c.l.b16 %v231
    %v252 = vunpack.c.l.b16 %v232
    %v253 = vunpack.c.l.b16 %v233
    %v254 = vunpack.c.l.b16 %v234
    %v255 = vpack.c.b16 %v252, %v251
    %v256 = vpack.c.b16 %v254, %v253
    %vm259 = vcmask 261120
    %v261 = vsel %vm259, %v246, 0
    %263 = vmatpush.bf16.msra.mxu0 0
    %264 = vmatpush.bf16.msra.mxu0 0
    %265 = vmatpush.bf16.msra.mxu0 0
    %266 = vmatpush.bf16.msra.mxu0 0
    %267 = vmatpush.bf16.msra.mxu0 0
    %268 = vmatpush.bf16.msra.mxu0 0
    %269 = vmatpush.bf16.msra.mxu0 %v256
    %270 = vmatpush.bf16.msra.mxu0 %v255
    %271 = vmatmul.bf16.gmra.mxu0 %v261
    %v272 = vpop.f32.mrf.mxu0
    %v273 = vadd.f32 0.0, %v272
    %v274 = vpop.f32.mrf.mxu0
    %275 = vdwg.mxu0
    %v276 = vpack.c.bf16 %v245, %v245
    %v281 = vunpack.c.l.b16 %v236
    %v282 = vunpack.c.l.b16 %v237
    %v283 = vunpack.c.l.b16 %v238
    %v284 = vunpack.c.l.b16 %v239
    %v285 = vpack.c.b16 %v282, %v281
    %v286 = vpack.c.b16 %v284, %v283
    %v290 = vsel %vm259, %v276, 0
    %292 = vmatpush.bf16.msra.mxu0 0
    %293 = vmatpush.bf16.msra.mxu0 0
    %294 = vmatpush.bf16.msra.mxu0 0
    %295 = vmatpush.bf16.msra.mxu0 0
    %296 = vmatpush.bf16.msra.mxu0 0
    %297 = vmatpush.bf16.msra.mxu0 0
    %298 = vmatpush.bf16.msra.mxu0 %v286
    %299 = vmatpush.bf16.msra.mxu0 %v285
    %300 = vmatmul.bf16.gmra.mxu0 %v290
    %v301 = vpop.f32.mrf.mxu0
    %v302 = vadd.f32 0.0, %v301
    %v303 = vpop.f32.mrf.mxu0
    %304 = vdwg.mxu0
    %v305 = vld [vmem:[#allocation3] sm:$0xff]
    %v306 = vadd.f32 %v305, %v273
    %v307 = vld [vmem:[#allocation3 + $0x78] sm:$0xff]
    %v308 = vadd.f32 %v307, %v302
    %v309 = vxor.u32 %v306, 2147483648
    %v310 = vmul.f32 %v309, 1.442695
    %v311 = vpow.pop %v310
    %v312 = vadd.f32 %v311, 1.0
    %v313 = vrcp.pop %v312
    %v314 = vmul.f32 %v312, %v313
    %v315 = vsub.f32 1.0, %v314
    %v316 = vmul.f32 %v313, %v315
    %v317 = vadd.f32 %v313, %v316
    %vm318 = vweird.f32 %v312
    %vm319 = vweird.f32 %v313
    %vm320 = vmor %vm318, %vm319
    %v321 = vsel %vm320, %v313, %v317
    %v322 = vand.u32 2147483647, %v312
    %vm323 = vcmp.eq.f32.partialorder %v322, 8.507059e+37
    %v324 = vand.u32 %v312, 2147483648
    %v325 = vor.u32 1.1754944e-38, %v324
    %v326 = vsel %vm323, %v325, %v321
    %v327 = vmul.f32 1.0, %v326
    %v328 = vtanh.pop %v306
    %v329 = vmul.f32 %v327, 0.0
    %331 = vrot.lane.b32.xlu0 %v328, 64
    %v332 = vpop.permute.xlu0 %331
    %v334 = vmul.f32 %v327, %v332
    %336 = vrot.lane.b32.xlu0 %v334, 32
    %v337 = vpop.permute.xlu0 %336
    %v339 = vadd.f32 %v329, %v337
    %v340 = vtanh.pop %v339
    %342 = vrot.lane.b32.xlu0 %v340, 64
    %v343 = vpop.permute.xlu0 %342
    %v345 = vmul.f32 %v327, %v343
    %v346 = vxor.u32 %v308, 2147483648
    %v347 = vmul.f32 %v346, 1.442695
    %v348 = vpow.pop %v347
    %v349 = vadd.f32 %v348, 1.0
    %v350 = vrcp.pop %v349
    %v351 = vmul.f32 %v349, %v350
    %v352 = vsub.f32 1.0, %v351
    %v353 = vmul.f32 %v350, %v352
    %v354 = vadd.f32 %v350, %v353
    %vm355 = vweird.f32 %v349
    %vm356 = vweird.f32 %v350
    %vm357 = vmor %vm355, %vm356
    %v358 = vsel %vm357, %v350, %v354
    %v359 = vand.u32 2147483647, %v349
    %vm360 = vcmp.eq.f32.partialorder %v359, 8.507059e+37
    %v361 = vand.u32 %v349, 2147483648
    %v362 = vor.u32 1.1754944e-38, %v361
    %v363 = vsel %vm360, %v362, %v358
    %v364 = vmul.f32 1.0, %v363
    %v365 = vtanh.pop %v308
    %v366 = vmul.f32 %v364, 0.0
    %368 = vrot.lane.b32.xlu0 %v365, 64
    %v369 = vpop.permute.xlu0 %368
    %v371 = vmul.f32 %v364, %v369
    %373 = vrot.lane.b32.xlu0 %v371, 32
    %v374 = vpop.permute.xlu0 %373
    %v376 = vadd.f32 %v366, %v374
    %v377 = vtanh.pop %v376
    %379 = vrot.lane.b32.xlu0 %v377, 64
    %v380 = vpop.permute.xlu0 %379
    %v382 = vmul.f32 %v364, %v380
    %384 = vrot.lane.b32.xlu0 %v345, 32
    %v385 = vpop.permute.xlu0 %384
    %vm387 = vcmask 253952
    %388 = vst.msk [vmem:[#allocation7] sm:$0x1] %vm387, %v385
    %390 = vrot.lane.b32.xlu0 %v382, 64
    %v391 = vpop.permute.xlu0 %390
    %vm393 = vcmask 516352
    %394 = vst.msk [vmem:[#allocation7 + $0x7] sm:$0x1] %vm393, %v391
    %s395 = scalar_lea.vmem [#allocation7], 8
    %vm396 = vcmask 254977
    %397 = vst.msk [vmem:[%s395 - $0x1] sm:$0x2] %vm396, %v385
    %vm398 = vcmask 517377
    %399 = vst.msk [vmem:[%s395 + $0x6] sm:$0x2] %vm398, %v391
    %v400 = vpack.c.bf16 %v345, %v345
    %402 = vrot.lane.b32.xlu0 %v400, 32
    %v403 = vpop.permute.xlu0 %402
    %v405 = vsel %vm259, %v403, 0
    %407 = vmatpush.bf16.msra.mxu0 0
    %408 = vmatpush.bf16.msra.mxu0 0
    %409 = vmatpush.bf16.msra.mxu0 0
    %410 = vmatpush.bf16.msra.mxu0 0
    %411 = vmatpush.bf16.msra.mxu0 0
    %412 = vmatpush.bf16.msra.mxu0 0
    %413 = vmatpush.bf16.msra.mxu0 %v256
    %414 = vmatpush.bf16.msra.mxu0 %v255
    %415 = vmatmul.bf16.gmra.mxu0 %v405
    %v416 = vpop.f32.mrf.mxu0
    %v417 = vadd.f32 0.0, %v416
    %v418 = vpop.f32.mrf.mxu0
    %419 = vdwg.mxu0
    %v420 = vpack.c.bf16 %v382, %v382
    %422 = vrot.lane.b32.xlu0 %v420, 32
    %v423 = vpop.permute.xlu0 %422
    %v425 = vsel %vm259, %v423, 0
    %427 = vmatpush.bf16.msra.mxu0 0
    %428 = vmatpush.bf16.msra.mxu0 0
    %429 = vmatpush.bf16.msra.mxu0 0
    %430 = vmatpush.bf16.msra.mxu0 0
    %431 = vmatpush.bf16.msra.mxu0 0
    %432 = vmatpush.bf16.msra.mxu0 0
    %433 = vmatpush.bf16.msra.mxu0 %v286
    %434 = vmatpush.bf16.msra.mxu0 %v285
    %435 = vmatmul.bf16.gmra.mxu0 %v425
    %v436 = vpop.f32.mrf.mxu0
    %v437 = vadd.f32 0.0, %v436
    %v438 = vpop.f32.mrf.mxu0
    %439 = vdwg.mxu0
    %v440 = vld [vmem:[#allocation3 + $0x10] sm:$0xff]
    %v441 = vadd.f32 %v440, %v417
    %v442 = vld [vmem:[#allocation3 + $0x68] sm:$0xff]
    %v443 = vadd.f32 %v442, %v437
    %v444 = vxor.u32 %v441, 2147483648
    %v445 = vmul.f32 %v444, 1.442695
    %v446 = vpow.pop %v445
    %v447 = vadd.f32 %v446, 1.0
    %v448 = vrcp.pop %v447
    %v449 = vmul.f32 %v447, %v448
    %v450 = vsub.f32 1.0, %v449
    %v451 = vmul.f32 %v448, %v450
    %v452 = vadd.f32 %v448, %v451
    %vm453 = vweird.f32 %v447
    %vm454 = vweird.f32 %v448
    %vm455 = vmor %vm453, %vm454
    %v456 = vsel %vm455, %v448, %v452
    %v457 = vand.u32 2147483647, %v447
    %vm458 = vcmp.eq.f32.partialorder %v457, 8.507059e+37
    %v459 = vand.u32 %v447, 2147483648
    %v460 = vor.u32 1.1754944e-38, %v459
    %v461 = vsel %vm458, %v460, %v456
    %v462 = vmul.f32 1.0, %v461
    %v463 = vtanh.pop %v441
    %v464 = vmul.f32 %v462, %v339
    %466 = vrot.lane.b32.xlu0 %v463, 64
    %v467 = vpop.permute.xlu0 %466
    %v469 = vmul.f32 %v462, %v467
    %471 = vrot.lane.b32.xlu0 %v469, 32
    %v472 = vpop.permute.xlu0 %471
    %v474 = vadd.f32 %v464, %v472
    %v475 = vtanh.pop %v474
    %477 = vrot.lane.b32.xlu0 %v475, 64
    %v478 = vpop.permute.xlu0 %477
    %v480 = vmul.f32 %v462, %v478
    %v481 = vxor.u32 %v443, 2147483648
    %v482 = vmul.f32 %v481, 1.442695
    %v483 = vpow.pop %v482
    %v484 = vadd.f32 %v483, 1.0
    %v485 = vrcp.pop %v484
    %v486 = vmul.f32 %v484, %v485
    %v487 = vsub.f32 1.0, %v486
    %v488 = vmul.f32 %v485, %v487
    %v489 = vadd.f32 %v485, %v488
    %vm490 = vweird.f32 %v484
    %vm491 = vweird.f32 %v485
    %vm492 = vmor %vm490, %vm491
    %v493 = vsel %vm492, %v485, %v489
    %v494 = vand.u32 2147483647, %v484
    %vm495 = vcmp.eq.f32.partialorder %v494, 8.507059e+37
    %v496 = vand.u32 %v484, 2147483648
    %v497 = vor.u32 1.1754944e-38, %v496
    %v498 = vsel %vm495, %v497, %v493
    %v499 = vmul.f32 1.0, %v498
    %v500 = vtanh.pop %v443
    %v501 = vmul.f32 %v499, %v376
    %503 = vrot.lane.b32.xlu0 %v500, 64
    %v504 = vpop.permute.xlu0 %503
    %v506 = vmul.f32 %v499, %v504
    %508 = vrot.lane.b32.xlu0 %v506, 32
    %v509 = vpop.permute.xlu0 %508
    %v511 = vadd.f32 %v501, %v509
    %v512 = vtanh.pop %v511
    %514 = vrot.lane.b32.xlu0 %v512, 64
    %v515 = vpop.permute.xlu0 %514
    %v517 = vmul.f32 %v499, %v515
    %519 = vrot.lane.b32.xlu0 %v480, 32
    %v520 = vpop.permute.xlu0 %519
    %522 = vst.msk [vmem:[#allocation7 + $0x1] sm:$0x1] %vm387, %v520
    %524 = vrot.lane.b32.xlu0 %v517, 64
    %v525 = vpop.permute.xlu0 %524
    %527 = vst.msk [vmem:[#allocation7 + $0x6] sm:$0x1] %vm393, %v525
    %528 = vst.msk [vmem:[%s395] sm:$0x2] %vm396, %v520
    %529 = vst.msk [vmem:[%s395 + $0x5] sm:$0x2] %vm398, %v525
    %v530 = vpack.c.bf16 %v480, %v480
    %532 = vrot.lane.b32.xlu0 %v530, 32
    %v533 = vpop.permute.xlu0 %532
    %v535 = vsel %vm259, %v533, 0
    %537 = vmatpush.bf16.msra.mxu0 0
    %538 = vmatpush.bf16.msra.mxu0 0
    %539 = vmatpush.bf16.msra.mxu0 0
    %540 = vmatpush.bf16.msra.mxu0 0
    %541 = vmatpush.bf16.msra.mxu0 0
    %542 = vmatpush.bf16.msra.mxu0 0
    %543 = vmatpush.bf16.msra.mxu0 %v256
    %544 = vmatpush.bf16.msra.mxu0 %v255
    %545 = vmatmul.bf16.gmra.mxu0 %v535
    %v546 = vpop.f32.mrf.mxu0
    %v547 = vadd.f32 0.0, %v546
    %v548 = vpop.f32.mrf.mxu0
    %549 = vdwg.mxu0
    %v550 = vpack.c.bf16 %v517, %v517
    %552 = vrot.lane.b32.xlu0 %v550, 32
    %v553 = vpop.permute.xlu0 %552
    %v555 = vsel %vm259, %v553, 0
    %557 = vmatpush.bf16.msra.mxu0 0
    %558 = vmatpush.bf16.msra.mxu0 0
    %559 = vmatpush.bf16.msra.mxu0 0
    %560 = vmatpush.bf16.msra.mxu0 0
    %561 = vmatpush.bf16.msra.mxu0 0
    %562 = vmatpush.bf16.msra.mxu0 0
    %563 = vmatpush.bf16.msra.mxu0 %v286
    %564 = vmatpush.bf16.msra.mxu0 %v285
    %565 = vmatmul.bf16.gmra.mxu0 %v555
    %v566 = vpop.f32.mrf.mxu0
    %v567 = vadd.f32 0.0, %v566
    %v568 = vpop.f32.mrf.mxu0
    %569 = vdwg.mxu0
    %v570 = vld [vmem:[#allocation3 + $0x20] sm:$0xff]
    %v571 = vadd.f32 %v570, %v547
    %v572 = vld [vmem:[#allocation3 + $0x58] sm:$0xff]
    %v573 = vadd.f32 %v572, %v567
    %v574 = vxor.u32 %v571, 2147483648
    %v575 = vmul.f32 %v574, 1.442695
    %v576 = vpow.pop %v575
    %v577 = vadd.f32 %v576, 1.0
    %v578 = vrcp.pop %v577
    %v579 = vmul.f32 %v577, %v578
    %v580 = vsub.f32 1.0, %v579
    %v581 = vmul.f32 %v578, %v580
    %v582 = vadd.f32 %v578, %v581
    %vm583 = vweird.f32 %v577
    %vm584 = vweird.f32 %v578
    %vm585 = vmor %vm583, %vm584
    %v586 = vsel %vm585, %v578, %v582
    %v587 = vand.u32 2147483647, %v577
    %vm588 = vcmp.eq.f32.partialorder %v587, 8.507059e+37
    %v589 = vand.u32 %v577, 2147483648
    %v590 = vor.u32 1.1754944e-38, %v589
    %v591 = vsel %vm588, %v590, %v586
    %v592 = vmul.f32 1.0, %v591
    %v593 = vtanh.pop %v571
    %v594 = vmul.f32 %v592, %v474
    %596 = vrot.lane.b32.xlu0 %v593, 64
    %v597 = vpop.permute.xlu0 %596
    %v599 = vmul.f32 %v592, %v597
    %601 = vrot.lane.b32.xlu0 %v599, 32
    %v602 = vpop.permute.xlu0 %601
    %v604 = vadd.f32 %v594, %v602
    %v605 = vtanh.pop %v604
    %607 = vrot.lane.b32.xlu0 %v605, 64
    %v608 = vpop.permute.xlu0 %607
    %v610 = vmul.f32 %v592, %v608
    %v611 = vxor.u32 %v573, 2147483648
    %v612 = vmul.f32 %v611, 1.442695
    %v613 = vpow.pop %v612
    %v614 = vadd.f32 %v613, 1.0
    %v615 = vrcp.pop %v614
    %v616 = vmul.f32 %v614, %v615
    %v617 = vsub.f32 1.0, %v616
    %v618 = vmul.f32 %v615, %v617
    %v619 = vadd.f32 %v615, %v618
    %vm620 = vweird.f32 %v614
    %vm621 = vweird.f32 %v615
    %vm622 = vmor %vm620, %vm621
    %v623 = vsel %vm622, %v615, %v619
    %v624 = vand.u32 2147483647, %v614
    %vm625 = vcmp.eq.f32.partialorder %v624, 8.507059e+37
    %v626 = vand.u32 %v614, 2147483648
    %v627 = vor.u32 1.1754944e-38, %v626
    %v628 = vsel %vm625, %v627, %v623
    %v629 = vmul.f32 1.0, %v628
    %v630 = vtanh.pop %v573
    %v631 = vmul.f32 %v629, %v511
    %633 = vrot.lane.b32.xlu0 %v630, 64
    %v634 = vpop.permute.xlu0 %633
    %v636 = vmul.f32 %v629, %v634
    %638 = vrot.lane.b32.xlu0 %v636, 32
    %v639 = vpop.permute.xlu0 %638
    %v641 = vadd.f32 %v631, %v639
    %v642 = vtanh.pop %v641
    %644 = vrot.lane.b32.xlu0 %v642, 64
    %v645 = vpop.permute.xlu0 %644
    %v647 = vmul.f32 %v629, %v645
    %649 = vrot.lane.b32.xlu0 %v610, 32
    %v650 = vpop.permute.xlu0 %649
    %652 = vst.msk [vmem:[#allocation7 + $0x2] sm:$0x1] %vm387, %v650
    %654 = vrot.lane.b32.xlu0 %v647, 64
    %v655 = vpop.permute.xlu0 %654
    %657 = vst.msk [vmem:[#allocation7 + $0x5] sm:$0x1] %vm393, %v655
    %658 = vst.msk [vmem:[%s395 + $0x1] sm:$0x2] %vm396, %v650
    %659 = vst.msk [vmem:[%s395 + $0x4] sm:$0x2] %vm398, %v655
    %v660 = vpack.c.bf16 %v610, %v610
    %662 = vrot.lane.b32.xlu0 %v660, 32
    %v663 = vpop.permute.xlu0 %662
    %v665 = vsel %vm259, %v663, 0
    %667 = vmatpush.bf16.msra.mxu0 0
    %668 = vmatpush.bf16.msra.mxu0 0
    %669 = vmatpush.bf16.msra.mxu0 0
    %670 = vmatpush.bf16.msra.mxu0 0
    %671 = vmatpush.bf16.msra.mxu0 0
    %672 = vmatpush.bf16.msra.mxu0 0
    %673 = vmatpush.bf16.msra.mxu0 %v256
    %674 = vmatpush.bf16.msra.mxu0 %v255
    %675 = vmatmul.bf16.gmra.mxu0 %v665
    %v676 = vpop.f32.mrf.mxu0
    %v677 = vadd.f32 0.0, %v676
    %v678 = vpop.f32.mrf.mxu0
    %679 = vdwg.mxu0
    %v680 = vpack.c.bf16 %v647, %v647
    %682 = vrot.lane.b32.xlu0 %v680, 32
    %v683 = vpop.permute.xlu0 %682
    %v685 = vsel %vm259, %v683, 0
    %687 = vmatpush.bf16.msra.mxu0 0
    %688 = vmatpush.bf16.msra.mxu0 0
    %689 = vmatpush.bf16.msra.mxu0 0
    %690 = vmatpush.bf16.msra.mxu0 0
    %691 = vmatpush.bf16.msra.mxu0 0
    %692 = vmatpush.bf16.msra.mxu0 0
    %693 = vmatpush.bf16.msra.mxu0 %v286
    %694 = vmatpush.bf16.msra.mxu0 %v285
    %695 = vmatmul.bf16.gmra.mxu0 %v685
    %v696 = vpop.f32.mrf.mxu0
    %v697 = vadd.f32 0.0, %v696
    %v698 = vpop.f32.mrf.mxu0
    %699 = vdwg.mxu0
    %v700 = vld [vmem:[#allocation3 + $0x30] sm:$0xff]
    %v701 = vadd.f32 %v700, %v677
    %v702 = vld [vmem:[#allocation3 + $0x48] sm:$0xff]
    %v703 = vadd.f32 %v702, %v697
    %v704 = vxor.u32 %v701, 2147483648
    %v705 = vmul.f32 %v704, 1.442695
    %v706 = vpow.pop %v705
    %v707 = vadd.f32 %v706, 1.0
    %v708 = vrcp.pop %v707
    %v709 = vmul.f32 %v707, %v708
    %v710 = vsub.f32 1.0, %v709
    %v711 = vmul.f32 %v708, %v710
    %v712 = vadd.f32 %v708, %v711
    %vm713 = vweird.f32 %v707
    %vm714 = vweird.f32 %v708
    %vm715 = vmor %vm713, %vm714
    %v716 = vsel %vm715, %v708, %v712
    %v717 = vand.u32 2147483647, %v707
    %vm718 = vcmp.eq.f32.partialorder %v717, 8.507059e+37
    %v719 = vand.u32 %v707, 2147483648
    %v720 = vor.u32 1.1754944e-38, %v719
    %v721 = vsel %vm718, %v720, %v716
    %v722 = vmul.f32 1.0, %v721
    %v723 = vtanh.pop %v701
    %v724 = vmul.f32 %v722, %v604
    %726 = vrot.lane.b32.xlu0 %v723, 64
    %v727 = vpop.permute.xlu0 %726
    %v729 = vmul.f32 %v722, %v727
    %731 = vrot.lane.b32.xlu0 %v729, 32
    %v732 = vpop.permute.xlu0 %731
    %v734 = vadd.f32 %v724, %v732
    %v735 = vtanh.pop %v734
    %737 = vrot.lane.b32.xlu0 %v735, 64
    %v738 = vpop.permute.xlu0 %737
    %v740 = vmul.f32 %v722, %v738
    %v741 = vxor.u32 %v703, 2147483648
    %v742 = vmul.f32 %v741, 1.442695
    %v743 = vpow.pop %v742
    %v744 = vadd.f32 %v743, 1.0
    %v745 = vrcp.pop %v744
    %v746 = vmul.f32 %v744, %v745
    %v747 = vsub.f32 1.0, %v746
    %v748 = vmul.f32 %v745, %v747
    %v749 = vadd.f32 %v745, %v748
    %vm750 = vweird.f32 %v744
    %vm751 = vweird.f32 %v745
    %vm752 = vmor %vm750, %vm751
    %v753 = vsel %vm752, %v745, %v749
    %v754 = vand.u32 2147483647, %v744
    %vm755 = vcmp.eq.f32.partialorder %v754, 8.507059e+37
    %v756 = vand.u32 %v744, 2147483648
    %v757 = vor.u32 1.1754944e-38, %v756
    %v758 = vsel %vm755, %v757, %v753
    %v759 = vmul.f32 1.0, %v758
    %v760 = vtanh.pop %v703
    %v761 = vmul.f32 %v759, %v641
    %763 = vrot.lane.b32.xlu0 %v760, 64
    %v764 = vpop.permute.xlu0 %763
    %v766 = vmul.f32 %v759, %v764
    %768 = vrot.lane.b32.xlu0 %v766, 32
    %v769 = vpop.permute.xlu0 %768
    %v771 = vadd.f32 %v761, %v769
    %v772 = vtanh.pop %v771
    %774 = vrot.lane.b32.xlu0 %v772, 64
    %v775 = vpop.permute.xlu0 %774
    %v777 = vmul.f32 %v759, %v775
    %779 = vrot.lane.b32.xlu0 %v740, 32
    %v780 = vpop.permute.xlu0 %779
    %782 = vst.msk [vmem:[#allocation7 + $0x3] sm:$0x1] %vm387, %v780
    %784 = vrot.lane.b32.xlu0 %v777, 64
    %v785 = vpop.permute.xlu0 %784
    %787 = vst.msk [vmem:[#allocation7 + $0x4] sm:$0x1] %vm393, %v785
    %788 = vst.msk [vmem:[%s395 + $0x2] sm:$0x2] %vm396, %v780
    %789 = vst.msk [vmem:[%s395 + $0x3] sm:$0x2] %vm398, %v785
    %v790 = vpack.c.bf16 %v740, %v740
    %792 = vrot.lane.b32.xlu0 %v790, 32
    %v793 = vpop.permute.xlu0 %792
    %v795 = vsel %vm259, %v793, 0
    %797 = vmatpush.bf16.msra.mxu0 0
    %798 = vmatpush.bf16.msra.mxu0 0
    %799 = vmatpush.bf16.msra.mxu0 0
    %800 = vmatpush.bf16.msra.mxu0 0
    %801 = vmatpush.bf16.msra.mxu0 0
    %802 = vmatpush.bf16.msra.mxu0 0
    %803 = vmatpush.bf16.msra.mxu0 %v256
    %804 = vmatpush.bf16.msra.mxu0 %v255
    %805 = vmatmul.bf16.gmra.mxu0 %v795
    %v806 = vpop.f32.mrf.mxu0
    %v807 = vadd.f32 0.0, %v806
    %v808 = vpop.f32.mrf.mxu0
    %809 = vdwg.mxu0
    %v810 = vpack.c.bf16 %v777, %v777
    %812 = vrot.lane.b32.xlu0 %v810, 32
    %v813 = vpop.permute.xlu0 %812
    %v815 = vsel %vm259, %v813, 0
    %817 = vmatpush.bf16.msra.mxu0 0
    %818 = vmatpush.bf16.msra.mxu0 0
    %819 = vmatpush.bf16.msra.mxu0 0
    %820 = vmatpush.bf16.msra.mxu0 0
    %821 = vmatpush.bf16.msra.mxu0 0
    %822 = vmatpush.bf16.msra.mxu0 0
    %823 = vmatpush.bf16.msra.mxu0 %v286
    %824 = vmatpush.bf16.msra.mxu0 %v285
    %825 = vmatmul.bf16.gmra.mxu0 %v815
    %v826 = vpop.f32.mrf.mxu0
    %v827 = vadd.f32 0.0, %v826
    %v828 = vpop.f32.mrf.mxu0
    %829 = vdwg.mxu0
    %v830 = vld [vmem:[#allocation3 + $0x40] sm:$0xff]
    %v831 = vadd.f32 %v830, %v807
    %v832 = vld [vmem:[#allocation3 + $0x38] sm:$0xff]
    %v833 = vadd.f32 %v832, %v827
    %v834 = vxor.u32 %v831, 2147483648
    %v835 = vmul.f32 %v834, 1.442695
    %v836 = vpow.pop %v835
    %v837 = vadd.f32 %v836, 1.0
    %v838 = vrcp.pop %v837
    %v839 = vmul.f32 %v837, %v838
    %v840 = vsub.f32 1.0, %v839
    %v841 = vmul.f32 %v838, %v840
    %v842 = vadd.f32 %v838, %v841
    %vm843 = vweird.f32 %v837
    %vm844 = vweird.f32 %v838
    %vm845 = vmor %vm843, %vm844
    %v846 = vsel %vm845, %v838, %v842
    %v847 = vand.u32 2147483647, %v837
    %vm848 = vcmp.eq.f32.partialorder %v847, 8.507059e+37
    %v849 = vand.u32 %v837, 2147483648
    %v850 = vor.u32 1.1754944e-38, %v849
    %v851 = vsel %vm848, %v850, %v846
    %v852 = vmul.f32 1.0, %v851
    %v853 = vtanh.pop %v831
    %v854 = vmul.f32 %v852, %v734
    %856 = vrot.lane.b32.xlu0 %v853, 64
    %v857 = vpop.permute.xlu0 %856
    %v859 = vmul.f32 %v852, %v857
    %861 = vrot.lane.b32.xlu0 %v859, 32
    %v862 = vpop.permute.xlu0 %861
    %v864 = vadd.f32 %v854, %v862
    %v865 = vtanh.pop %v864
    %867 = vrot.lane.b32.xlu0 %v865, 64
    %v868 = vpop.permute.xlu0 %867
    %v870 = vmul.f32 %v852, %v868
    %v871 = vxor.u32 %v833, 2147483648
    %v872 = vmul.f32 %v871, 1.442695
    %v873 = vpow.pop %v872
    %v874 = vadd.f32 %v873, 1.0
    %v875 = vrcp.pop %v874
    %v876 = vmul.f32 %v874, %v875
    %v877 = vsub.f32 1.0, %v876
    %v878 = vmul.f32 %v875, %v877
    %v879 = vadd.f32 %v875, %v878
    %vm880 = vweird.f32 %v874
    %vm881 = vweird.f32 %v875
    %vm882 = vmor %vm880, %vm881
    %v883 = vsel %vm882, %v875, %v879
    %v884 = vand.u32 2147483647, %v874
    %vm885 = vcmp.eq.f32.partialorder %v884, 8.507059e+37
    %v886 = vand.u32 %v874, 2147483648
    %v887 = vor.u32 1.1754944e-38, %v886
    %v888 = vsel %vm885, %v887, %v883
    %v889 = vmul.f32 1.0, %v888
    %v890 = vtanh.pop %v833
    %v891 = vmul.f32 %v889, %v771
    %893 = vrot.lane.b32.xlu0 %v890, 64
    %v894 = vpop.permute.xlu0 %893
    %v896 = vmul.f32 %v889, %v894
    %898 = vrot.lane.b32.xlu0 %v896, 32
    %v899 = vpop.permute.xlu0 %898
    %v901 = vadd.f32 %v891, %v899
    %v902 = vtanh.pop %v901
    %904 = vrot.lane.b32.xlu0 %v902, 64
    %v905 = vpop.permute.xlu0 %904
    %v907 = vmul.f32 %v889, %v905
    %909 = vrot.lane.b32.xlu0 %v870, 32
    %v910 = vpop.permute.xlu0 %909
    %912 = vst.msk [vmem:[#allocation7 + $0x4] sm:$0x1] %vm387, %v910
    %914 = vrot.lane.b32.xlu0 %v907, 64
    %v915 = vpop.permute.xlu0 %914
    %917 = vst.msk [vmem:[#allocation7 + $0x3] sm:$0x1] %vm393, %v915
    %918 = vst.msk [vmem:[%s395 + $0x3] sm:$0x2] %vm396, %v910
    %919 = vst.msk [vmem:[%s395 + $0x2] sm:$0x2] %vm398, %v915
    %v920 = vpack.c.bf16 %v870, %v870
    %922 = vrot.lane.b32.xlu0 %v920, 32
    %v923 = vpop.permute.xlu0 %922
    %v925 = vsel %vm259, %v923, 0
    %927 = vmatpush.bf16.msra.mxu0 0
    %928 = vmatpush.bf16.msra.mxu0 0
    %929 = vmatpush.bf16.msra.mxu0 0
    %930 = vmatpush.bf16.msra.mxu0 0
    %931 = vmatpush.bf16.msra.mxu0 0
    %932 = vmatpush.bf16.msra.mxu0 0
    %933 = vmatpush.bf16.msra.mxu0 %v256
    %934 = vmatpush.bf16.msra.mxu0 %v255
    %935 = vmatmul.bf16.gmra.mxu0 %v925
    %v936 = vpop.f32.mrf.mxu0
    %v937 = vadd.f32 0.0, %v936
    %v938 = vpop.f32.mrf.mxu0
    %939 = vdwg.mxu0
    %v940 = vpack.c.bf16 %v907, %v907
    %942 = vrot.lane.b32.xlu0 %v940, 32
    %v943 = vpop.permute.xlu0 %942
    %v945 = vsel %vm259, %v943, 0
    %947 = vmatpush.bf16.msra.mxu0 0
    %948 = vmatpush.bf16.msra.mxu0 0
    %949 = vmatpush.bf16.msra.mxu0 0
    %950 = vmatpush.bf16.msra.mxu0 0
    %951 = vmatpush.bf16.msra.mxu0 0
    %952 = vmatpush.bf16.msra.mxu0 0
    %953 = vmatpush.bf16.msra.mxu0 %v286
    %954 = vmatpush.bf16.msra.mxu0 %v285
    %955 = vmatmul.bf16.gmra.mxu0 %v945
    %v956 = vpop.f32.mrf.mxu0
    %v957 = vadd.f32 0.0, %v956
    %v958 = vpop.f32.mrf.mxu0
    %959 = vdwg.mxu0
    %v960 = vld [vmem:[#allocation3 + $0x50] sm:$0xff]
    %v961 = vadd.f32 %v960, %v937
    %v962 = vld [vmem:[#allocation3 + $0x28] sm:$0xff]
    %v963 = vadd.f32 %v962, %v957
    %v964 = vxor.u32 %v961, 2147483648
    %v965 = vmul.f32 %v964, 1.442695
    %v966 = vpow.pop %v965
    %v967 = vadd.f32 %v966, 1.0
    %v968 = vrcp.pop %v967
    %v969 = vmul.f32 %v967, %v968
    %v970 = vsub.f32 1.0, %v969
    %v971 = vmul.f32 %v968, %v970
    %v972 = vadd.f32 %v968, %v971
    %vm973 = vweird.f32 %v967
    %vm974 = vweird.f32 %v968
    %vm975 = vmor %vm973, %vm974
    %v976 = vsel %vm975, %v968, %v972
    %v977 = vand.u32 2147483647, %v967
    %vm978 = vcmp.eq.f32.partialorder %v977, 8.507059e+37
    %v979 = vand.u32 %v967, 2147483648
    %v980 = vor.u32 1.1754944e-38, %v979
    %v981 = vsel %vm978, %v980, %v976
    %v982 = vmul.f32 1.0, %v981
    %v983 = vtanh.pop %v961
    %v984 = vmul.f32 %v982, %v864
    %986 = vrot.lane.b32.xlu0 %v983, 64
    %v987 = vpop.permute.xlu0 %986
    %v989 = vmul.f32 %v982, %v987
    %991 = vrot.lane.b32.xlu0 %v989, 32
    %v992 = vpop.permute.xlu0 %991
    %v994 = vadd.f32 %v984, %v992
    %v995 = vtanh.pop %v994
    %997 = vrot.lane.b32.xlu0 %v995, 64
    %v998 = vpop.permute.xlu0 %997
    %v1000 = vmul.f32 %v982, %v998
    %v1001 = vxor.u32 %v963, 2147483648
    %v1002 = vmul.f32 %v1001, 1.442695
    %v1003 = vpow.pop %v1002
    %v1004 = vadd.f32 %v1003, 1.0
    %v1005 = vrcp.pop %v1004
    %v1006 = vmul.f32 %v1004, %v1005
    %v1007 = vsub.f32 1.0, %v1006
    %v1008 = vmul.f32 %v1005, %v1007
    %v1009 = vadd.f32 %v1005, %v1008
    %vm1010 = vweird.f32 %v1004
    %vm1011 = vweird.f32 %v1005
    %vm1012 = vmor %vm1010, %vm1011
    %v1013 = vsel %vm1012, %v1005, %v1009
    %v1014 = vand.u32 2147483647, %v1004
    %vm1015 = vcmp.eq.f32.partialorder %v1014, 8.507059e+37
    %v1016 = vand.u32 %v1004, 2147483648
    %v1017 = vor.u32 1.1754944e-38, %v1016
    %v1018 = vsel %vm1015, %v1017, %v1013
    %v1019 = vmul.f32 1.0, %v1018
    %v1020 = vtanh.pop %v963
    %v1021 = vmul.f32 %v1019, %v901
    %1023 = vrot.lane.b32.xlu0 %v1020, 64
    %v1024 = vpop.permute.xlu0 %1023
    %v1026 = vmul.f32 %v1019, %v1024
    %1028 = vrot.lane.b32.xlu0 %v1026, 32
    %v1029 = vpop.permute.xlu0 %1028
    %v1031 = vadd.f32 %v1021, %v1029
    %v1032 = vtanh.pop %v1031
    %1034 = vrot.lane.b32.xlu0 %v1032, 64
    %v1035 = vpop.permute.xlu0 %1034
    %v1037 = vmul.f32 %v1019, %v1035
    %1039 = vrot.lane.b32.xlu0 %v1000, 32
    %v1040 = vpop.permute.xlu0 %1039
    %1042 = vst.msk [vmem:[#allocation7 + $0x5] sm:$0x1] %vm387, %v1040
    %1044 = vrot.lane.b32.xlu0 %v1037, 64
    %v1045 = vpop.permute.xlu0 %1044
    %1047 = vst.msk [vmem:[#allocation7 + $0x2] sm:$0x1] %vm393, %v1045
    %1048 = vst.msk [vmem:[%s395 + $0x4] sm:$0x2] %vm396, %v1040
    %1049 = vst.msk [vmem:[%s395 + $0x1] sm:$0x2] %vm398, %v1045
    %v1050 = vpack.c.bf16 %v1000, %v1000
    %1052 = vrot.lane.b32.xlu0 %v1050, 32
    %v1053 = vpop.permute.xlu0 %1052
    %v1055 = vsel %vm259, %v1053, 0
    %1057 = vmatpush.bf16.msra.mxu0 0
    %1058 = vmatpush.bf16.msra.mxu0 0
    %1059 = vmatpush.bf16.msra.mxu0 0
    %1060 = vmatpush.bf16.msra.mxu0 0
    %1061 = vmatpush.bf16.msra.mxu0 0
    %1062 = vmatpush.bf16.msra.mxu0 0
    %1063 = vmatpush.bf16.msra.mxu0 %v256
    %1064 = vmatpush.bf16.msra.mxu0 %v255
    %1065 = vmatmul.bf16.gmra.mxu0 %v1055
    %v1066 = vpop.f32.mrf.mxu0
    %v1067 = vadd.f32 0.0, %v1066
    %v1068 = vpop.f32.mrf.mxu0
    %1069 = vdwg.mxu0
    %v1070 = vpack.c.bf16 %v1037, %v1037
    %1072 = vrot.lane.b32.xlu0 %v1070, 32
    %v1073 = vpop.permute.xlu0 %1072
    %v1075 = vsel %vm259, %v1073, 0
    %1077 = vmatpush.bf16.msra.mxu0 0
    %1078 = vmatpush.bf16.msra.mxu0 0
    %1079 = vmatpush.bf16.msra.mxu0 0
    %1080 = vmatpush.bf16.msra.mxu0 0
    %1081 = vmatpush.bf16.msra.mxu0 0
    %1082 = vmatpush.bf16.msra.mxu0 0
    %1083 = vmatpush.bf16.msra.mxu0 %v286
    %1084 = vmatpush.bf16.msra.mxu0 %v285
    %1085 = vmatmul.bf16.gmra.mxu0 %v1075
    %v1086 = vpop.f32.mrf.mxu0
    %v1087 = vadd.f32 0.0, %v1086
    %v1088 = vpop.f32.mrf.mxu0
    %1089 = vdwg.mxu0
    %v1090 = vld [vmem:[#allocation3 + $0x60] sm:$0xff]
    %v1091 = vadd.f32 %v1090, %v1067
    %v1092 = vld [vmem:[#allocation3 + $0x18] sm:$0xff]
    %v1093 = vadd.f32 %v1092, %v1087
    %v1094 = vxor.u32 %v1091, 2147483648
    %v1095 = vmul.f32 %v1094, 1.442695
    %v1096 = vpow.pop %v1095
    %v1097 = vadd.f32 %v1096, 1.0
    %v1098 = vrcp.pop %v1097
    %v1099 = vmul.f32 %v1097, %v1098
    %v1100 = vsub.f32 1.0, %v1099
    %v1101 = vmul.f32 %v1098, %v1100
    %v1102 = vadd.f32 %v1098, %v1101
    %vm1103 = vweird.f32 %v1097
    %vm1104 = vweird.f32 %v1098
    %vm1105 = vmor %vm1103, %vm1104
    %v1106 = vsel %vm1105, %v1098, %v1102
    %v1107 = vand.u32 2147483647, %v1097
    %vm1108 = vcmp.eq.f32.partialorder %v1107, 8.507059e+37
    %v1109 = vand.u32 %v1097, 2147483648
    %v1110 = vor.u32 1.1754944e-38, %v1109
    %v1111 = vsel %vm1108, %v1110, %v1106
    %v1112 = vmul.f32 1.0, %v1111
    %v1113 = vtanh.pop %v1091
    %v1114 = vmul.f32 %v1112, %v994
    %1116 = vrot.lane.b32.xlu0 %v1113, 64
    %v1117 = vpop.permute.xlu0 %1116
    %v1119 = vmul.f32 %v1112, %v1117
    %1121 = vrot.lane.b32.xlu0 %v1119, 32
    %v1122 = vpop.permute.xlu0 %1121
    %v1124 = vadd.f32 %v1114, %v1122
    %v1125 = vtanh.pop %v1124
    %1127 = vrot.lane.b32.xlu0 %v1125, 64
    %v1128 = vpop.permute.xlu0 %1127
    %v1130 = vmul.f32 %v1112, %v1128
    %v1131 = vxor.u32 %v1093, 2147483648
    %v1132 = vmul.f32 %v1131, 1.442695
    %v1133 = vpow.pop %v1132
    %v1134 = vadd.f32 %v1133, 1.0
    %v1135 = vrcp.pop %v1134
    %v1136 = vmul.f32 %v1134, %v1135
    %v1137 = vsub.f32 1.0, %v1136
    %v1138 = vmul.f32 %v1135, %v1137
    %v1139 = vadd.f32 %v1135, %v1138
    %vm1140 = vweird.f32 %v1134
    %vm1141 = vweird.f32 %v1135
    %vm1142 = vmor %vm1140, %vm1141
    %v1143 = vsel %vm1142, %v1135, %v1139
    %v1144 = vand.u32 2147483647, %v1134
    %vm1145 = vcmp.eq.f32.partialorder %v1144, 8.507059e+37
    %v1146 = vand.u32 %v1134, 2147483648
    %v1147 = vor.u32 1.1754944e-38, %v1146
    %v1148 = vsel %vm1145, %v1147, %v1143
    %v1149 = vmul.f32 1.0, %v1148
    %v1150 = vtanh.pop %v1093
    %v1151 = vmul.f32 %v1149, %v1031
    %1153 = vrot.lane.b32.xlu0 %v1150, 64
    %v1154 = vpop.permute.xlu0 %1153
    %v1156 = vmul.f32 %v1149, %v1154
    %1158 = vrot.lane.b32.xlu0 %v1156, 32
    %v1159 = vpop.permute.xlu0 %1158
    %v1161 = vadd.f32 %v1151, %v1159
    %v1162 = vtanh.pop %v1161
    %1164 = vrot.lane.b32.xlu0 %v1162, 64
    %v1165 = vpop.permute.xlu0 %1164
    %v1167 = vmul.f32 %v1149, %v1165
    %1169 = vrot.lane.b32.xlu0 %v1130, 32
    %v1170 = vpop.permute.xlu0 %1169
    %1172 = vst.msk [vmem:[#allocation7 + $0x6] sm:$0x1] %vm387, %v1170
    %1174 = vrot.lane.b32.xlu0 %v1167, 64
    %v1175 = vpop.permute.xlu0 %1174
    %1177 = vst.msk [vmem:[#allocation7 + $0x1] sm:$0x1] %vm393, %v1175
    %1178 = vst.msk [vmem:[%s395 + $0x5] sm:$0x2] %vm396, %v1170
    %1179 = vst.msk [vmem:[%s395] sm:$0x2] %vm398, %v1175
    %v1180 = vpack.c.bf16 %v1130, %v1130
    %1182 = vrot.lane.b32.xlu0 %v1180, 32
    %v1183 = vpop.permute.xlu0 %1182
    %v1185 = vsel %vm259, %v1183, 0
    %1187 = vmatpush.bf16.msra.mxu0 0
    %1188 = vmatpush.bf16.msra.mxu0 0
    %1189 = vmatpush.bf16.msra.mxu0 0
    %1190 = vmatpush.bf16.msra.mxu0 0
    %1191 = vmatpush.bf16.msra.mxu0 0
    %1192 = vmatpush.bf16.msra.mxu0 0
    %1193 = vmatpush.bf16.msra.mxu0 %v256
    %1194 = vmatpush.bf16.msra.mxu0 %v255
    %1195 = vmatmul.bf16.gmra.mxu0 %v1185
    %v1196 = vpop.f32.mrf.mxu0
    %v1197 = vadd.f32 0.0, %v1196
    %v1198 = vpop.f32.mrf.mxu0
    %1199 = vdwg.mxu0
    %v1200 = vpack.c.bf16 %v1167, %v1167
    %1202 = vrot.lane.b32.xlu0 %v1200, 32
    %v1203 = vpop.permute.xlu0 %1202
    %v1205 = vsel %vm259, %v1203, 0
    %1207 = vmatpush.bf16.msra.mxu0 0
    %1208 = vmatpush.bf16.msra.mxu0 0
    %1209 = vmatpush.bf16.msra.mxu0 0
    %1210 = vmatpush.bf16.msra.mxu0 0
    %1211 = vmatpush.bf16.msra.mxu0 0
    %1212 = vmatpush.bf16.msra.mxu0 0
    %1213 = vmatpush.bf16.msra.mxu0 %v286
    %1214 = vmatpush.bf16.msra.mxu0 %v285
    %1215 = vmatmul.bf16.gmra.mxu0 %v1205
    %v1216 = vpop.f32.mrf.mxu0
    %v1217 = vadd.f32 0.0, %v1216
    %v1218 = vpop.f32.mrf.mxu0
    %1219 = vdwg.mxu0
    %v1220 = vld [vmem:[#allocation3 + $0x70] sm:$0xff]
    %v1221 = vadd.f32 %v1220, %v1197
    %v1222 = vld [vmem:[#allocation3 + $0x8] sm:$0xff]
    %v1223 = vadd.f32 %v1222, %v1217
    %v1224 = vxor.u32 %v1221, 2147483648
    %v1225 = vmul.f32 %v1224, 1.442695
    %v1226 = vpow.pop %v1225
    %v1227 = vadd.f32 %v1226, 1.0
    %v1228 = vrcp.pop %v1227
    %v1229 = vmul.f32 %v1227, %v1228
    %v1230 = vsub.f32 1.0, %v1229
    %v1231 = vmul.f32 %v1228, %v1230
    %v1232 = vadd.f32 %v1228, %v1231
    %vm1233 = vweird.f32 %v1227
    %vm1234 = vweird.f32 %v1228
    %vm1235 = vmor %vm1233, %vm1234
    %v1236 = vsel %vm1235, %v1228, %v1232
    %v1237 = vand.u32 2147483647, %v1227
    %vm1238 = vcmp.eq.f32.partialorder %v1237, 8.507059e+37
    %v1239 = vand.u32 %v1227, 2147483648
    %v1240 = vor.u32 1.1754944e-38, %v1239
    %v1241 = vsel %vm1238, %v1240, %v1236
    %v1242 = vmul.f32 1.0, %v1241
    %v1243 = vtanh.pop %v1221
    %v1244 = vmul.f32 %v1242, %v1124
    %1246 = vrot.lane.b32.xlu0 %v1243, 64
    %v1247 = vpop.permute.xlu0 %1246
    %v1249 = vmul.f32 %v1242, %v1247
    %1251 = vrot.lane.b32.xlu0 %v1249, 32
    %v1252 = vpop.permute.xlu0 %1251
    %v1254 = vadd.f32 %v1244, %v1252
    %v1255 = vtanh.pop %v1254
    %1257 = vrot.lane.b32.xlu0 %v1255, 64
    %v1258 = vpop.permute.xlu0 %1257
    %v1260 = vmul.f32 %v1242, %v1258
    %v1261 = vxor.u32 %v1223, 2147483648
    %v1262 = vmul.f32 %v1261, 1.442695
    %v1263 = vpow.pop %v1262
    %v1264 = vadd.f32 %v1263, 1.0
    %v1265 = vrcp.pop %v1264
    %v1266 = vmul.f32 %v1264, %v1265
    %v1267 = vsub.f32 1.0, %v1266
    %v1268 = vmul.f32 %v1265, %v1267
    %v1269 = vadd.f32 %v1265, %v1268
    %vm1270 = vweird.f32 %v1264
    %vm1271 = vweird.f32 %v1265
    %vm1272 = vmor %vm1270, %vm1271
    %v1273 = vsel %vm1272, %v1265, %v1269
    %v1274 = vand.u32 2147483647, %v1264
    %vm1275 = vcmp.eq.f32.partialorder %v1274, 8.507059e+37
    %v1276 = vand.u32 %v1264, 2147483648
    %v1277 = vor.u32 1.1754944e-38, %v1276
    %v1278 = vsel %vm1275, %v1277, %v1273
    %v1279 = vmul.f32 1.0, %v1278
    %v1280 = vtanh.pop %v1223
    %v1281 = vmul.f32 %v1279, %v1161
    %1283 = vrot.lane.b32.xlu0 %v1280, 64
    %v1284 = vpop.permute.xlu0 %1283
    %v1286 = vmul.f32 %v1279, %v1284
    %1288 = vrot.lane.b32.xlu0 %v1286, 32
    %v1289 = vpop.permute.xlu0 %1288
    %v1291 = vadd.f32 %v1281, %v1289
    %v1292 = vtanh.pop %v1291
    %1294 = vrot.lane.b32.xlu0 %v1292, 64
    %v1295 = vpop.permute.xlu0 %1294
    %v1297 = vmul.f32 %v1279, %v1295
    %1299 = vrot.lane.b32.xlu0 %v1260, 32
    %v1300 = vpop.permute.xlu0 %1299
    %1302 = vst.msk [vmem:[#allocation7 + $0x7] sm:$0x1] %vm387, %v1300
    %1304 = vrot.lane.b32.xlu0 %v1297, 64
    %v1305 = vpop.permute.xlu0 %1304
    %1307 = vst.msk [vmem:[#allocation7] sm:$0x1] %vm393, %v1305
    %1308 = vst.msk [vmem:[%s395 + $0x6] sm:$0x2] %vm396, %v1300
    %1309 = vst.msk [vmem:[%s395 - $0x1] sm:$0x2] %vm398, %v1305
    %vm1310 = vcmask 254976
    %1311 = vst.msk [vmem:[#allocation8] sm:$0x3] %vm1310, %v1300
    %1312 = vrot.lane.b32.xlu0 %v1297, 32
    %v1313 = vpop.permute.xlu0 %1312
    %s1315 = scalar_lea.vmem [#allocation8], 2
    %1316 = vst.msk [vmem:[%s1315] sm:$0x3] %vm1310, %v1313
    // Predicated region
    $region30: #{tpu_custom_call.1} parent=1 // pred_check
      _
    $region31: #{tpu_custom_call.1} parent=1 // pred_check_branch
      %1318 = sbr.rel (0) target = $region33
    $region32: #{tpu_custom_call.1} parent=1 // pred_region
      %1320 = vsyncadd [#allocation5], 0
      %s1321 = sshll.u32 [#allocation7], 4
      %s1322 = int_to_ptr.vmem [resolvable:$true] %s1321
      %s1323 = sshll.u32 %s6, 4
      %s1324 = int_to_ptr.hbm [resolvable:$true] %s1323
      %1329 = dma.vmem_to_hbm [thread:$0]  %s1322, 256, %s1324, [#allocation5], 128, 128, 8
    $region33: #{tpu_custom_call.1} parent=1 // pred_fallthru
      _
    // Predicated region
    $region34: #{tpu_custom_call.1} parent=1 // pred_check
      _
    $region35: #{tpu_custom_call.1} parent=1 // pred_check_branch
      %1331 = sbr.rel (0) target = $region37
    $region36: #{tpu_custom_call.1} parent=1 // pred_region
      %1333 = vsyncadd [#allocation9], 0
      %s1334 = sshll.u32 [#allocation8], 4
      %s1335 = int_to_ptr.vmem [resolvable:$true] %s1334
      %s1336 = sshll.u32 %s7, 4
      %s1337 = int_to_ptr.hbm [resolvable:$true] %s1336
      %1342 = dma.vmem_to_hbm [thread:$0]  %s1335, 64, %s1337, [#allocation9], 32, 32, 2
    $region37: #{tpu_custom_call.1} parent=1 // pred_fallthru
      _
    // Predicated region
    $region38: #{tpu_custom_call.1} parent=1 // pred_check
      _
    $region39: #{tpu_custom_call.1} parent=1 // pred_check_branch
      %1344 = sbr.rel (0) target = $region41
    $region40: #{tpu_custom_call.1} parent=1 // pred_region
      %1346 = dma.done [#allocation5], 256
    $region41: #{tpu_custom_call.1} parent=1 // pred_fallthru
      _
    // Predicated region
    $region42: #{tpu_custom_call.1} parent=1 // pred_check
      _
    $region43: #{tpu_custom_call.1} parent=1 // pred_check_branch
      %1348 = sbr.rel (0) target = $region45
    $region44: #{tpu_custom_call.1} parent=1 // pred_region
      %1350 = dma.done [#allocation9], 64
    $region45: #{tpu_custom_call.1} parent=1 // pred_fallthru
      _
    %1351 = vsyncpa [#allocation5], 1
    %1352 = vsyncpa [#allocation9], 1
    %1353 = vsyncpa [#allocation6], 1

</llo_original>
